<compile_context>
chip_gen: v7x
topology: tpu7x:2x2x1
jax: 0.10.0
libtpu: 0.0.40
codegen_flags: <defaults>
</compile_context>

<pallas_src>
import functools

import jax
import jax.numpy as jnp
from jax import lax
from jax.experimental import pallas as pl
from jax.experimental.pallas import tpu as pltpu

_LN_EPS = 1e-5


def _layer_norm(x, gamma, beta, eps=_LN_EPS):
    mu = jnp.mean(x, axis=-1, keepdims=True)
    var = jnp.mean(jnp.square(x - mu), axis=-1, keepdims=True)
    return (x - mu) * lax.rsqrt(var + eps) * gamma + beta


def _encoder_layer_kernel(src_ref, wqkv_ref, bqkv_ref, wo_ref, bo_ref,
                          w1_ref, b1_ref, w2_ref, b2_ref,
                          g1_ref, be1_ref, g2_ref, be2_ref,
                          out_ref, *, num_heads):
    BT, S, C = src_ref.shape            # block_b samples per grid step
    M = BT * S                          # fold batch*seq into the matmul M dim
    Dh = C // num_heads

    x = src_ref[...].reshape(M, C).astype(jnp.float32)   # residual path (f32)
    x_bf = x.astype(jnp.bfloat16)

    # ----- QKV projection (bf16 operands, f32 accumulation) -----
    # 1/sqrt(Dh) is already folded into the Q columns of wqkv / bqkv.
    qkv = jnp.dot(x_bf, wqkv_ref[...], preferred_element_type=jnp.float32)
    qkv = qkv + bqkv_ref[...]                              # (M, 3C) f32
    qkv_bf = qkv.astype(jnp.bfloat16)

    # ----- multi-head self-attention, Wo-split accumulation -----
    wo = wo_ref[...]                                       # (C, C) bf16
    attn = jnp.zeros((M, C), jnp.float32)
    for h in range(num_heads):                             # small static unroll
        lo = h * Dh
        qh = qkv_bf[:, lo:lo + Dh].reshape(BT, S, Dh)
        kh = qkv_bf[:, C + lo:C + lo + Dh].reshape(BT, S, Dh)
        vh = qkv_bf[:, 2 * C + lo:2 * C + lo + Dh].reshape(BT, S, Dh)

        # scores (BT, S, S): contract head dim, batch over the samples in the
        # block (no transpose materialized).
        s = lax.dot_general(qh, kh, (((2,), (2,)), ((0,), (0,))),
                            preferred_element_type=jnp.float32)
        s = s - jnp.max(s, axis=-1, keepdims=True)
        p = jnp.exp(s)
        p = p * pl.reciprocal(jnp.sum(p, axis=-1, keepdims=True), approx=True)

        # per-head context (BT, S, Dh) -> fold directly into out-projection
        oh = lax.dot_general(p.astype(jnp.bfloat16), vh,
                             (((2,), (1,)), ((0,), (0,))),
                             preferred_element_type=jnp.float32)
        attn = attn + jnp.dot(oh.reshape(M, Dh).astype(jnp.bfloat16),
                              wo[lo:lo + Dh, :],
                              preferred_element_type=jnp.float32)
    attn = attn + bo_ref[...]

    # ----- residual + LayerNorm1 (f32) -----
    y = _layer_norm(x + attn, g1_ref[...], be1_ref[...])

    # ----- feed-forward: fc2(GELU(fc1(y))) -----
    h1 = jnp.dot(y.astype(jnp.bfloat16), w1_ref[...],
                 preferred_element_type=jnp.float32) + b1_ref[...]
    h1 = jax.nn.gelu(h1)                  # tanh approx (see TODO above)
    f = jnp.dot(h1.astype(jnp.bfloat16), w2_ref[...],
                preferred_element_type=jnp.float32) + b2_ref[...]

    # ----- residual + LayerNorm2 (f32) -----
    z = _layer_norm(y + f, g2_ref[...], be2_ref[...])
    out_ref[...] = z.reshape(BT, S, C).astype(out_ref.dtype)


def prepare_encoder_params(params, num_heads):
    """One-time weight prep, outside the hot path.

    Transposes Linear weights to (in, out), folds the 1/sqrt(Dh) attention
    scale into the Q projection, casts matmul weights to bf16 (single MXU
    pass), keeps biases / LayerNorm params lane-dense in f32.
    """
    f32, bf16 = jnp.float32, jnp.bfloat16
    C = params["out_proj_weight"].shape[0]
    CM = params["fc1_weight"].shape[0]
    Dh = C // num_heads
    scale = 1.0 / (Dh ** 0.5)

    col_scale = jnp.concatenate(
        [jnp.full((C,), scale, f32), jnp.ones((2 * C,), f32)])
    wqkv = (jnp.asarray(params["in_proj_weight"], f32).T * col_scale).astype(bf16)
    bqkv = (jnp.asarray(params["in_proj_bias"], f32) * col_scale).reshape(1, 3 * C)
    wo = jnp.asarray(params["out_proj_weight"], f32).T.astype(bf16)
    bo = jnp.asarray(params["out_proj_bias"], f32).reshape(1, C)
    w1 = jnp.asarray(params["fc1_weight"], f32).T.astype(bf16)
    b1 = jnp.asarray(params["fc1_bias"], f32).reshape(1, CM)
    w2 = jnp.asarray(params["fc2_weight"], f32).T.astype(bf16)
    b2 = jnp.asarray(params["fc2_bias"], f32).reshape(1, C)
    g1 = jnp.asarray(params["norm1_weight"], f32).reshape(1, C)
    be1 = jnp.asarray(params["norm1_bias"], f32).reshape(1, C)
    g2 = jnp.asarray(params["norm2_weight"], f32).reshape(1, C)
    be2 = jnp.asarray(params["norm2_bias"], f32).reshape(1, C)
    return (wqkv, bqkv, wo, bo, w1, b1, w2, b2, g1, be1, g2, be2)


def _pick_block_b(B, S):
    """Fold enough samples per grid step to give the MXU ~256 M-rows."""
    bb = min(B, max(1, 256 // S))
    while B % bb:
        bb -= 1
    return bb


def transformer_encoder_layer(src, prep, num_heads, block_b=None):
    """Fused TransformerEncoderLayer.forward_post (pos/masks None, dropout=0).

    src: (B, S, C); prep: output of prepare_encoder_params(params, num_heads).
    """
    B, S, C = src.shape
    (wqkv, bqkv, wo, bo, w1, b1, w2, b2, g1, be1, g2, be2) = prep
    CM = w1.shape[1]
    if block_b is None:
        block_b = _pick_block_b(B, S)
    assert B % block_b == 0
    grid = (B // block_b,)

    const = lambda b: (0, 0)

    def wspec(shape):
        # Weights are grid-invariant: single-buffer them (double-buffering a
        # constant operand just doubles VMEM residency).
        return pl.BlockSpec(shape, const, pipeline_mode=pl.Buffered(1))

    kernel = functools.partial(_encoder_layer_kernel, num_heads=num_heads)

    return pl.pallas_call(
        kernel,
        out_shape=jax.ShapeDtypeStruct((B, S, C), src.dtype),
        grid_spec=pltpu.PrefetchScalarGridSpec(
            num_scalar_prefetch=0,
            grid=grid,
            in_specs=[
                pl.BlockSpec((block_b, S, C), lambda b: (b, 0, 0)),  # src slab
                wspec((C, 3 * C)),                                   # Wqkv
                wspec((1, 3 * C)),                                   # bqkv
                wspec((C, C)),                                       # Wout
                wspec((1, C)),                                       # bout
                wspec((C, CM)),                                      # W1
                wspec((1, CM)),                                      # b1
                wspec((CM, C)),                                      # W2
                wspec((1, C)),                                       # b2
                wspec((1, C)),                                       # ln1 gamma
                wspec((1, C)),                                       # ln1 beta
                wspec((1, C)),                                       # ln2 gamma
                wspec((1, C)),                                       # ln2 beta
            ],
            out_specs=pl.BlockSpec((block_b, S, C), lambda b: (b, 0, 0)),
        ),
        compiler_params=pltpu.CompilerParams(
            # Short grid at small B: sharding it across TensorCores would only
            # duplicate the weight DMA, so keep it serial.
            dimension_semantics=("arbitrary",),
            vmem_limit_bytes=64 * 1024 * 1024,
        ),
    )(src, wqkv, bqkv, wo, bo, w1, b1, w2, b2, g1, be1, g2, be2)


def transformer_encoder_layer_ref(src, params, num_heads):
    """Pure-JAX f32 reference matching the PyTorch module (forward_post)."""
    hp = lax.Precision.HIGHEST
    x = src.astype(jnp.float32)
    B, S, C = x.shape
    Dh = C // num_heads

    qkv = jnp.einsum("bsc,dc->bsd", x,
                     params["in_proj_weight"].astype(jnp.float32),
                     precision=hp) + params["in_proj_bias"].astype(jnp.float32)
    q, k, v = jnp.split(qkv, 3, axis=-1)

    def to_heads(t):
        return t.reshape(B, S, num_heads, Dh).transpose(0, 2, 1, 3)

    q, k, v = to_heads(q), to_heads(k), to_heads(v)
    s = jnp.einsum("bhqd,bhkd->bhqk", q, k, precision=hp) / (Dh ** 0.5)
    s = s - jnp.max(s, axis=-1, keepdims=True)
    p = jnp.exp(s)
    p = p / jnp.sum(p, axis=-1, keepdims=True)
    o = jnp.einsum("bhqk,bhkd->bhqd", p, v, precision=hp)
    o = o.transpose(0, 2, 1, 3).reshape(B, S, C)
    o = jnp.einsum("bsc,dc->bsd", o,
                   params["out_proj_weight"].astype(jnp.float32),
                   precision=hp) + params["out_proj_bias"].astype(jnp.float32)

    def ln(t, g, b, eps=_LN_EPS):
        mu = jnp.mean(t, axis=-1, keepdims=True)
        var = jnp.mean(jnp.square(t - mu), axis=-1, keepdims=True)
        return (t - mu) * lax.rsqrt(var + eps) * g + b

    y = ln(x + o, params["norm1_weight"].astype(jnp.float32),
           params["norm1_bias"].astype(jnp.float32))
    h1 = jnp.einsum("bsc,mc->bsm", y,
                    params["fc1_weight"].astype(jnp.float32),
                    precision=hp) + params["fc1_bias"].astype(jnp.float32)
    h1 = jax.nn.gelu(h1)
    f = jnp.einsum("bsm,cm->bsc", h1,
                   params["fc2_weight"].astype(jnp.float32),
                   precision=hp) + params["fc2_bias"].astype(jnp.float32)
    z = ln(y + f, params["norm2_weight"].astype(jnp.float32),
           params["norm2_bias"].astype(jnp.float32))
    return z.astype(src.dtype)


if __name__ == "__main__":
    key = jax.random.PRNGKey(0)
    # Small but lane-dense shapes: batch=2, seq=16, c1=128, cm=256, heads=4.
    B, S, C, CM, H = 2, 16, 128, 256, 4
    keys = jax.random.split(key, 14)

    def init(k, shape, scale):
        return scale * jax.random.normal(k, shape, dtype=jnp.float32)

    params = {
        "in_proj_weight": init(keys[0], (3 * C, C), C ** -0.5),
        "in_proj_bias": init(keys[1], (3 * C,), 0.02),
        "out_proj_weight": init(keys[2], (C, C), C ** -0.5),
        "out_proj_bias": init(keys[3], (C,), 0.02),
        "fc1_weight": init(keys[4], (CM, C), C ** -0.5),
        "fc1_bias": init(keys[5], (CM,), 0.02),
        "fc2_weight": init(keys[6], (C, CM), CM ** -0.5),
        "fc2_bias": init(keys[7], (C,), 0.02),
        "norm1_weight": 1.0 + init(keys[8], (C,), 0.05),
        "norm1_bias": init(keys[9], (C,), 0.02),
        "norm2_weight": 1.0 + init(keys[10], (C,), 0.05),
        "norm2_bias": init(keys[11], (C,), 0.02),
    }
    src = jax.random.normal(keys[12], (B, S, C), dtype=jnp.float32)

    prep = prepare_encoder_params(params, num_heads=H)   # one-time weight prep
    out = transformer_encoder_layer(src, prep, num_heads=H)
    out = jax.block_until_ready(out)

    ref = transformer_encoder_layer_ref(src, params, num_heads=H)
    assert out.shape == (B, S, C)
    # Kernel matmuls use bf16 MXU operands (f32 accumulation); compare against
    # the f32 reference with a bf16-appropriate tolerance.
    max_diff = jnp.max(jnp.abs(out - ref))
    assert jnp.allclose(out, ref, atol=2e-2, rtol=2e-2), (
        "mismatch vs reference, max abs diff = %s" % max_diff)

    print("KERNEL_OK")
</pallas_src>

<mosaic_0001>
module attributes {stable_mosaic.version = 11 : i64} {
  func.func @_encoder_layer_kernel(%arg0: i32, %arg1: memref<2x16x128xf32, #tpu.memory_space<vmem>>, %arg2: memref<128x384xbf16, #tpu.memory_space<vmem>>, %arg3: memref<1x384xf32, #tpu.memory_space<vmem>>, %arg4: memref<128x128xbf16, #tpu.memory_space<vmem>>, %arg5: memref<1x128xf32, #tpu.memory_space<vmem>>, %arg6: memref<128x256xbf16, #tpu.memory_space<vmem>>, %arg7: memref<1x256xf32, #tpu.memory_space<vmem>>, %arg8: memref<256x128xbf16, #tpu.memory_space<vmem>>, %arg9: memref<1x128xf32, #tpu.memory_space<vmem>>, %arg10: memref<1x128xf32, #tpu.memory_space<vmem>>, %arg11: memref<1x128xf32, #tpu.memory_space<vmem>>, %arg12: memref<1x128xf32, #tpu.memory_space<vmem>>, %arg13: memref<1x128xf32, #tpu.memory_space<vmem>>, %arg14: memref<2x16x128xf32, #tpu.memory_space<vmem>>) attributes {dimension_semantics = [#tpu.dimension_semantics<arbitrary>], iteration_bounds = array<i64: 1>, scalar_prefetch = 0 : i64, scratch_operands = 0 : i64, tpu.core_type = #tpu.core_type<tc>, window_params = [{transform_indices = @transform_0, window_bounds = array<i64: 2, 16, 128>}, {pipeline_mode = #tpu.pipeline_mode<synchronous>, transform_indices = @transform_1, window_bounds = array<i64: 128, 384>}, {pipeline_mode = #tpu.pipeline_mode<synchronous>, transform_indices = @transform_2, window_bounds = array<i64: 1, 384>}, {pipeline_mode = #tpu.pipeline_mode<synchronous>, transform_indices = @transform_3, window_bounds = array<i64: 128, 128>}, {pipeline_mode = #tpu.pipeline_mode<synchronous>, transform_indices = @transform_4, window_bounds = array<i64: 1, 128>}, {pipeline_mode = #tpu.pipeline_mode<synchronous>, transform_indices = @transform_5, window_bounds = array<i64: 128, 256>}, {pipeline_mode = #tpu.pipeline_mode<synchronous>, transform_indices = @transform_6, window_bounds = array<i64: 1, 256>}, {pipeline_mode = #tpu.pipeline_mode<synchronous>, transform_indices = @transform_7, window_bounds = array<i64: 256, 128>}, {pipeline_mode = #tpu.pipeline_mode<synchronous>, transform_indices = @transform_8, window_bounds = array<i64: 1, 128>}, {pipeline_mode = #tpu.pipeline_mode<synchronous>, transform_indices = @transform_9, window_bounds = array<i64: 1, 128>}, {pipeline_mode = #tpu.pipeline_mode<synchronous>, transform_indices = @transform_10, window_bounds = array<i64: 1, 128>}, {pipeline_mode = #tpu.pipeline_mode<synchronous>, transform_indices = @transform_11, window_bounds = array<i64: 1, 128>}, {pipeline_mode = #tpu.pipeline_mode<synchronous>, transform_indices = @transform_12, window_bounds = array<i64: 1, 128>}, {transform_indices = @transform_13, window_bounds = array<i64: 2, 16, 128>}]} {
    %c0 = arith.constant 0 : index
    %c0_0 = arith.constant 0 : index
    %c0_1 = arith.constant 0 : index
    %0 = vector.load %arg1[%c0, %c0_0, %c0_1] : memref<2x16x128xf32, #tpu.memory_space<vmem>>, vector<2x16x128xf32>
    %1 = vector.shape_cast %0 : vector<2x16x128xf32> to vector<32x128xf32>
    %2 = arith.truncf %1 : vector<32x128xf32> to vector<32x128xbf16>
    %c0_2 = arith.constant 0 : index
    %c0_3 = arith.constant 0 : index
    %3 = vector.load %arg2[%c0_2, %c0_3] : memref<128x384xbf16, #tpu.memory_space<vmem>>, vector<128x384xbf16>
    %cst = arith.constant dense<0.000000e+00> : vector<32x384xf32>
    %4 = tpu.matmul %2, %3, %cst {dimension_numbers = #tpu.dot_dimension_numbers<[1], [0], [0], [1], [0, 0, 1, 1], [], []>} : vector<32x128xbf16>, vector<128x384xbf16>, vector<32x384xf32> -> vector<32x384xf32>
    %c0_4 = arith.constant 0 : index
    %c0_5 = arith.constant 0 : index
    %5 = vector.load %arg3[%c0_4, %c0_5] : memref<1x384xf32, #tpu.memory_space<vmem>>, vector<1x384xf32>
    %6 = vector.broadcast %5 : vector<1x384xf32> to vector<32x384xf32>
    %7 = arith.addf %4, %6 : vector<32x384xf32>
    %8 = arith.truncf %7 : vector<32x384xf32> to vector<32x384xbf16>
    %c0_6 = arith.constant 0 : index
    %c0_7 = arith.constant 0 : index
    %9 = vector.load %arg4[%c0_6, %c0_7] : memref<128x128xbf16, #tpu.memory_space<vmem>>, vector<128x128xbf16>
    %cst_8 = arith.constant 0.000000e+00 : f32
    %10 = vector.broadcast %cst_8 : f32 to vector<32x128xf32>
    %11 = vector.extract_strided_slice %8 {offsets = [0, 0], sizes = [32, 32], strides = [1, 1]} : vector<32x384xbf16> to vector<32x32xbf16>
    %12 = vector.shape_cast %11 : vector<32x32xbf16> to vector<2x16x32xbf16>
    %13 = vector.extract_strided_slice %8 {offsets = [0, 128], sizes = [32, 32], strides = [1, 1]} : vector<32x384xbf16> to vector<32x32xbf16>
    %14 = vector.shape_cast %13 : vector<32x32xbf16> to vector<2x16x32xbf16>
    %15 = vector.extract_strided_slice %8 {offsets = [0, 256], sizes = [32, 32], strides = [1, 1]} : vector<32x384xbf16> to vector<32x32xbf16>
    %16 = vector.shape_cast %15 : vector<32x32xbf16> to vector<2x16x32xbf16>
    %cst_9 = arith.constant dense<0.000000e+00> : vector<2x16x16xf32>
    %17 = tpu.matmul %12, %14, %cst_9 {dimension_numbers = #tpu.dot_dimension_numbers<[2], [2], [1], [1], [0, 0, 0, 1, 1, 1], [0], [0]>} : vector<2x16x32xbf16>, vector<2x16x32xbf16>, vector<2x16x16xf32> -> vector<2x16x16xf32>
    %cst_10 = arith.constant dense<0xFF800000> : vector<2x16xf32>
    %18 = vector.multi_reduction <maximumf>, %17, %cst_10 [2] : vector<2x16x16xf32> to vector<2x16xf32>
    %19 = vector.shape_cast %18 : vector<2x16xf32> to vector<2x16x1xf32>
    %20 = vector.broadcast %19 : vector<2x16x1xf32> to vector<2x16x16xf32>
    %21 = arith.subf %17, %20 : vector<2x16x16xf32>
    %22 = math.exp %21 : vector<2x16x16xf32>
    %cst_11 = arith.constant dense<0.000000e+00> : vector<2x16xf32>
    %23 = vector.multi_reduction <add>, %22, %cst_11 [2] : vector<2x16x16xf32> to vector<2x16xf32>
    %24 = vector.shape_cast %23 : vector<2x16xf32> to vector<2x16x1xf32>
    %25 = tpu.reciprocal %24 {approx = true} : vector<2x16x1xf32> -> vector<2x16x1xf32>
    %26 = vector.broadcast %25 : vector<2x16x1xf32> to vector<2x16x16xf32>
    %27 = arith.mulf %22, %26 : vector<2x16x16xf32>
    %28 = arith.truncf %27 : vector<2x16x16xf32> to vector<2x16x16xbf16>
    %cst_12 = arith.constant dense<0.000000e+00> : vector<2x16x32xf32>
    %29 = tpu.matmul %28, %16, %cst_12 {dimension_numbers = #tpu.dot_dimension_numbers<[2], [1], [1], [2], [0, 0, 0, 1, 1, 2], [0], [0]>} : vector<2x16x16xbf16>, vector<2x16x32xbf16>, vector<2x16x32xf32> -> vector<2x16x32xf32>
    %30 = vector.shape_cast %29 : vector<2x16x32xf32> to vector<32x32xf32>
    %31 = arith.truncf %30 : vector<32x32xf32> to vector<32x32xbf16>
    %32 = vector.extract_strided_slice %9 {offsets = [0, 0], sizes = [32, 128], strides = [1, 1]} : vector<128x128xbf16> to vector<32x128xbf16>
    %cst_13 = arith.constant dense<0.000000e+00> : vector<32x128xf32>
    %33 = tpu.matmul %31, %32, %cst_13 {dimension_numbers = #tpu.dot_dimension_numbers<[1], [0], [0], [1], [0, 0, 1, 1], [], []>} : vector<32x32xbf16>, vector<32x128xbf16>, vector<32x128xf32> -> vector<32x128xf32>
    %34 = arith.addf %10, %33 : vector<32x128xf32>
    %35 = vector.extract_strided_slice %8 {offsets = [0, 32], sizes = [32, 32], strides = [1, 1]} : vector<32x384xbf16> to vector<32x32xbf16>
    %36 = vector.shape_cast %35 : vector<32x32xbf16> to vector<2x16x32xbf16>
    %37 = vector.extract_strided_slice %8 {offsets = [0, 160], sizes = [32, 32], strides = [1, 1]} : vector<32x384xbf16> to vector<32x32xbf16>
    %38 = vector.shape_cast %37 : vector<32x32xbf16> to vector<2x16x32xbf16>
    %39 = vector.extract_strided_slice %8 {offsets = [0, 288], sizes = [32, 32], strides = [1, 1]} : vector<32x384xbf16> to vector<32x32xbf16>
    %40 = vector.shape_cast %39 : vector<32x32xbf16> to vector<2x16x32xbf16>
    %cst_14 = arith.constant dense<0.000000e+00> : vector<2x16x16xf32>
    %41 = tpu.matmul %36, %38, %cst_14 {dimension_numbers = #tpu.dot_dimension_numbers<[2], [2], [1], [1], [0, 0, 0, 1, 1, 1], [0], [0]>} : vector<2x16x32xbf16>, vector<2x16x32xbf16>, vector<2x16x16xf32> -> vector<2x16x16xf32>
    %cst_15 = arith.constant dense<0xFF800000> : vector<2x16xf32>
    %42 = vector.multi_reduction <maximumf>, %41, %cst_15 [2] : vector<2x16x16xf32> to vector<2x16xf32>
    %43 = vector.shape_cast %42 : vector<2x16xf32> to vector<2x16x1xf32>
    %44 = vector.broadcast %43 : vector<2x16x1xf32> to vector<2x16x16xf32>
    %45 = arith.subf %41, %44 : vector<2x16x16xf32>
    %46 = math.exp %45 : vector<2x16x16xf32>
    %cst_16 = arith.constant dense<0.000000e+00> : vector<2x16xf32>
    %47 = vector.multi_reduction <add>, %46, %cst_16 [2] : vector<2x16x16xf32> to vector<2x16xf32>
    %48 = vector.shape_cast %47 : vector<2x16xf32> to vector<2x16x1xf32>
    %49 = tpu.reciprocal %48 {approx = true} : vector<2x16x1xf32> -> vector<2x16x1xf32>
    %50 = vector.broadcast %49 : vector<2x16x1xf32> to vector<2x16x16xf32>
    %51 = arith.mulf %46, %50 : vector<2x16x16xf32>
    %52 = arith.truncf %51 : vector<2x16x16xf32> to vector<2x16x16xbf16>
    %cst_17 = arith.constant dense<0.000000e+00> : vector<2x16x32xf32>
    %53 = tpu.matmul %52, %40, %cst_17 {dimension_numbers = #tpu.dot_dimension_numbers<[2], [1], [1], [2], [0, 0, 0, 1, 1, 2], [0], [0]>} : vector<2x16x16xbf16>, vector<2x16x32xbf16>, vector<2x16x32xf32> -> vector<2x16x32xf32>
    %54 = vector.shape_cast %53 : vector<2x16x32xf32> to vector<32x32xf32>
    %55 = arith.truncf %54 : vector<32x32xf32> to vector<32x32xbf16>
    %56 = vector.extract_strided_slice %9 {offsets = [32, 0], sizes = [32, 128], strides = [1, 1]} : vector<128x128xbf16> to vector<32x128xbf16>
    %cst_18 = arith.constant dense<0.000000e+00> : vector<32x128xf32>
    %57 = tpu.matmul %55, %56, %cst_18 {dimension_numbers = #tpu.dot_dimension_numbers<[1], [0], [0], [1], [0, 0, 1, 1], [], []>} : vector<32x32xbf16>, vector<32x128xbf16>, vector<32x128xf32> -> vector<32x128xf32>
    %58 = arith.addf %34, %57 : vector<32x128xf32>
    %59 = vector.extract_strided_slice %8 {offsets = [0, 64], sizes = [32, 32], strides = [1, 1]} : vector<32x384xbf16> to vector<32x32xbf16>
    %60 = vector.shape_cast %59 : vector<32x32xbf16> to vector<2x16x32xbf16>
    %61 = vector.extract_strided_slice %8 {offsets = [0, 192], sizes = [32, 32], strides = [1, 1]} : vector<32x384xbf16> to vector<32x32xbf16>
    %62 = vector.shape_cast %61 : vector<32x32xbf16> to vector<2x16x32xbf16>
    %63 = vector.extract_strided_slice %8 {offsets = [0, 320], sizes = [32, 32], strides = [1, 1]} : vector<32x384xbf16> to vector<32x32xbf16>
    %64 = vector.shape_cast %63 : vector<32x32xbf16> to vector<2x16x32xbf16>
    %cst_19 = arith.constant dense<0.000000e+00> : vector<2x16x16xf32>
    %65 = tpu.matmul %60, %62, %cst_19 {dimension_numbers = #tpu.dot_dimension_numbers<[2], [2], [1], [1], [0, 0, 0, 1, 1, 1], [0], [0]>} : vector<2x16x32xbf16>, vector<2x16x32xbf16>, vector<2x16x16xf32> -> vector<2x16x16xf32>
    %cst_20 = arith.constant dense<0xFF800000> : vector<2x16xf32>
    %66 = vector.multi_reduction <maximumf>, %65, %cst_20 [2] : vector<2x16x16xf32> to vector<2x16xf32>
    %67 = vector.shape_cast %66 : vector<2x16xf32> to vector<2x16x1xf32>
    %68 = vector.broadcast %67 : vector<2x16x1xf32> to vector<2x16x16xf32>
    %69 = arith.subf %65, %68 : vector<2x16x16xf32>
    %70 = math.exp %69 : vector<2x16x16xf32>
    %cst_21 = arith.constant dense<0.000000e+00> : vector<2x16xf32>
    %71 = vector.multi_reduction <add>, %70, %cst_21 [2] : vector<2x16x16xf32> to vector<2x16xf32>
    %72 = vector.shape_cast %71 : vector<2x16xf32> to vector<2x16x1xf32>
    %73 = tpu.reciprocal %72 {approx = true} : vector<2x16x1xf32> -> vector<2x16x1xf32>
    %74 = vector.broadcast %73 : vector<2x16x1xf32> to vector<2x16x16xf32>
    %75 = arith.mulf %70, %74 : vector<2x16x16xf32>
    %76 = arith.truncf %75 : vector<2x16x16xf32> to vector<2x16x16xbf16>
    %cst_22 = arith.constant dense<0.000000e+00> : vector<2x16x32xf32>
    %77 = tpu.matmul %76, %64, %cst_22 {dimension_numbers = #tpu.dot_dimension_numbers<[2], [1], [1], [2], [0, 0, 0, 1, 1, 2], [0], [0]>} : vector<2x16x16xbf16>, vector<2x16x32xbf16>, vector<2x16x32xf32> -> vector<2x16x32xf32>
    %78 = vector.shape_cast %77 : vector<2x16x32xf32> to vector<32x32xf32>
    %79 = arith.truncf %78 : vector<32x32xf32> to vector<32x32xbf16>
    %80 = vector.extract_strided_slice %9 {offsets = [64, 0], sizes = [32, 128], strides = [1, 1]} : vector<128x128xbf16> to vector<32x128xbf16>
    %cst_23 = arith.constant dense<0.000000e+00> : vector<32x128xf32>
    %81 = tpu.matmul %79, %80, %cst_23 {dimension_numbers = #tpu.dot_dimension_numbers<[1], [0], [0], [1], [0, 0, 1, 1], [], []>} : vector<32x32xbf16>, vector<32x128xbf16>, vector<32x128xf32> -> vector<32x128xf32>
    %82 = arith.addf %58, %81 : vector<32x128xf32>
    %83 = vector.extract_strided_slice %8 {offsets = [0, 96], sizes = [32, 32], strides = [1, 1]} : vector<32x384xbf16> to vector<32x32xbf16>
    %84 = vector.shape_cast %83 : vector<32x32xbf16> to vector<2x16x32xbf16>
    %85 = vector.extract_strided_slice %8 {offsets = [0, 224], sizes = [32, 32], strides = [1, 1]} : vector<32x384xbf16> to vector<32x32xbf16>
    %86 = vector.shape_cast %85 : vector<32x32xbf16> to vector<2x16x32xbf16>
    %87 = vector.extract_strided_slice %8 {offsets = [0, 352], sizes = [32, 32], strides = [1, 1]} : vector<32x384xbf16> to vector<32x32xbf16>
    %88 = vector.shape_cast %87 : vector<32x32xbf16> to vector<2x16x32xbf16>
    %cst_24 = arith.constant dense<0.000000e+00> : vector<2x16x16xf32>
    %89 = tpu.matmul %84, %86, %cst_24 {dimension_numbers = #tpu.dot_dimension_numbers<[2], [2], [1], [1], [0, 0, 0, 1, 1, 1], [0], [0]>} : vector<2x16x32xbf16>, vector<2x16x32xbf16>, vector<2x16x16xf32> -> vector<2x16x16xf32>
    %cst_25 = arith.constant dense<0xFF800000> : vector<2x16xf32>
    %90 = vector.multi_reduction <maximumf>, %89, %cst_25 [2] : vector<2x16x16xf32> to vector<2x16xf32>
    %91 = vector.shape_cast %90 : vector<2x16xf32> to vector<2x16x1xf32>
    %92 = vector.broadcast %91 : vector<2x16x1xf32> to vector<2x16x16xf32>
    %93 = arith.subf %89, %92 : vector<2x16x16xf32>
    %94 = math.exp %93 : vector<2x16x16xf32>
    %cst_26 = arith.constant dense<0.000000e+00> : vector<2x16xf32>
    %95 = vector.multi_reduction <add>, %94, %cst_26 [2] : vector<2x16x16xf32> to vector<2x16xf32>
    %96 = vector.shape_cast %95 : vector<2x16xf32> to vector<2x16x1xf32>
    %97 = tpu.reciprocal %96 {approx = true} : vector<2x16x1xf32> -> vector<2x16x1xf32>
    %98 = vector.broadcast %97 : vector<2x16x1xf32> to vector<2x16x16xf32>
    %99 = arith.mulf %94, %98 : vector<2x16x16xf32>
    %100 = arith.truncf %99 : vector<2x16x16xf32> to vector<2x16x16xbf16>
    %cst_27 = arith.constant dense<0.000000e+00> : vector<2x16x32xf32>
    %101 = tpu.matmul %100, %88, %cst_27 {dimension_numbers = #tpu.dot_dimension_numbers<[2], [1], [1], [2], [0, 0, 0, 1, 1, 2], [0], [0]>} : vector<2x16x16xbf16>, vector<2x16x32xbf16>, vector<2x16x32xf32> -> vector<2x16x32xf32>
    %102 = vector.shape_cast %101 : vector<2x16x32xf32> to vector<32x32xf32>
    %103 = arith.truncf %102 : vector<32x32xf32> to vector<32x32xbf16>
    %104 = vector.extract_strided_slice %9 {offsets = [96, 0], sizes = [32, 128], strides = [1, 1]} : vector<128x128xbf16> to vector<32x128xbf16>
    %cst_28 = arith.constant dense<0.000000e+00> : vector<32x128xf32>
    %105 = tpu.matmul %103, %104, %cst_28 {dimension_numbers = #tpu.dot_dimension_numbers<[1], [0], [0], [1], [0, 0, 1, 1], [], []>} : vector<32x32xbf16>, vector<32x128xbf16>, vector<32x128xf32> -> vector<32x128xf32>
    %106 = arith.addf %82, %105 : vector<32x128xf32>
    %c0_29 = arith.constant 0 : index
    %c0_30 = arith.constant 0 : index
    %107 = vector.load %arg5[%c0_29, %c0_30] : memref<1x128xf32, #tpu.memory_space<vmem>>, vector<1x128xf32>
    %108 = vector.broadcast %107 : vector<1x128xf32> to vector<32x128xf32>
    %109 = arith.addf %106, %108 : vector<32x128xf32>
    %110 = arith.addf %1, %109 : vector<32x128xf32>
    %c0_31 = arith.constant 0 : index
    %c0_32 = arith.constant 0 : index
    %111 = vector.load %arg10[%c0_31, %c0_32] : memref<1x128xf32, #tpu.memory_space<vmem>>, vector<1x128xf32>
    %c0_33 = arith.constant 0 : index
    %c0_34 = arith.constant 0 : index
    %112 = vector.load %arg11[%c0_33, %c0_34] : memref<1x128xf32, #tpu.memory_space<vmem>>, vector<1x128xf32>
    %cst_35 = arith.constant dense<0.000000e+00> : vector<32xf32>
    %113 = vector.multi_reduction <add>, %110, %cst_35 [1] : vector<32x128xf32> to vector<32xf32>
    %114 = vector.shape_cast %113 : vector<32xf32> to vector<32x1xf32>
    %cst_36 = arith.constant 1.280000e+02 : f32
    %115 = vector.broadcast %cst_36 : f32 to vector<32x1xf32>
    %116 = arith.divf %114, %115 : vector<32x1xf32>
    %117 = vector.broadcast %116 : vector<32x1xf32> to vector<32x128xf32>
    %118 = arith.subf %110, %117 : vector<32x128xf32>
    %119 = arith.mulf %118, %118 : vector<32x128xf32>
    %cst_37 = arith.constant dense<0.000000e+00> : vector<32xf32>
    %120 = vector.multi_reduction <add>, %119, %cst_37 [1] : vector<32x128xf32> to vector<32xf32>
    %121 = vector.shape_cast %120 : vector<32xf32> to vector<32x1xf32>
    %cst_38 = arith.constant 1.280000e+02 : f32
    %122 = vector.broadcast %cst_38 : f32 to vector<32x1xf32>
    %123 = arith.divf %121, %122 : vector<32x1xf32>
    %124 = vector.broadcast %116 : vector<32x1xf32> to vector<32x128xf32>
    %125 = arith.subf %110, %124 : vector<32x128xf32>
    %cst_39 = arith.constant 9.99999974E-6 : f32
    %126 = vector.broadcast %cst_39 : f32 to vector<32x1xf32>
    %127 = arith.addf %123, %126 : vector<32x1xf32>
    %128 = math.rsqrt %127 : vector<32x1xf32>
    %129 = vector.broadcast %128 : vector<32x1xf32> to vector<32x128xf32>
    %130 = arith.mulf %125, %129 : vector<32x128xf32>
    %131 = vector.broadcast %111 : vector<1x128xf32> to vector<32x128xf32>
    %132 = arith.mulf %130, %131 : vector<32x128xf32>
    %133 = vector.broadcast %112 : vector<1x128xf32> to vector<32x128xf32>
    %134 = arith.addf %132, %133 : vector<32x128xf32>
    %135 = arith.truncf %134 : vector<32x128xf32> to vector<32x128xbf16>
    %c0_40 = arith.constant 0 : index
    %c0_41 = arith.constant 0 : index
    %136 = vector.load %arg6[%c0_40, %c0_41] : memref<128x256xbf16, #tpu.memory_space<vmem>>, vector<128x256xbf16>
    %cst_42 = arith.constant dense<0.000000e+00> : vector<32x256xf32>
    %137 = tpu.matmul %135, %136, %cst_42 {dimension_numbers = #tpu.dot_dimension_numbers<[1], [0], [0], [1], [0, 0, 1, 1], [], []>} : vector<32x128xbf16>, vector<128x256xbf16>, vector<32x256xf32> -> vector<32x256xf32>
    %c0_43 = arith.constant 0 : index
    %c0_44 = arith.constant 0 : index
    %138 = vector.load %arg7[%c0_43, %c0_44] : memref<1x256xf32, #tpu.memory_space<vmem>>, vector<1x256xf32>
    %139 = vector.broadcast %138 : vector<1x256xf32> to vector<32x256xf32>
    %140 = arith.addf %137, %139 : vector<32x256xf32>
    %141 = arith.mulf %140, %140 : vector<32x256xf32>
    %142 = arith.mulf %140, %141 : vector<32x256xf32>
    %cst_45 = arith.constant 4.471500e-02 : f32
    %143 = vector.broadcast %cst_45 : f32 to vector<32x256xf32>
    %144 = arith.mulf %143, %142 : vector<32x256xf32>
    %145 = arith.addf %140, %144 : vector<32x256xf32>
    %cst_46 = arith.constant 0.797884583 : f32
    %146 = vector.broadcast %cst_46 : f32 to vector<32x256xf32>
    %147 = arith.mulf %146, %145 : vector<32x256xf32>
    %148 = math.tanh %147 : vector<32x256xf32>
    %cst_47 = arith.constant 1.000000e+00 : f32
    %149 = vector.broadcast %cst_47 : f32 to vector<32x256xf32>
    %150 = arith.addf %149, %148 : vector<32x256xf32>
    %cst_48 = arith.constant 5.000000e-01 : f32
    %151 = vector.broadcast %cst_48 : f32 to vector<32x256xf32>
    %152 = arith.mulf %151, %150 : vector<32x256xf32>
    %153 = arith.mulf %140, %152 : vector<32x256xf32>
    %154 = arith.truncf %153 : vector<32x256xf32> to vector<32x256xbf16>
    %c0_49 = arith.constant 0 : index
    %c0_50 = arith.constant 0 : index
    %155 = vector.load %arg8[%c0_49, %c0_50] : memref<256x128xbf16, #tpu.memory_space<vmem>>, vector<256x128xbf16>
    %cst_51 = arith.constant dense<0.000000e+00> : vector<32x128xf32>
    %156 = tpu.matmul %154, %155, %cst_51 {dimension_numbers = #tpu.dot_dimension_numbers<[1], [0], [0], [1], [0, 0, 1, 1], [], []>} : vector<32x256xbf16>, vector<256x128xbf16>, vector<32x128xf32> -> vector<32x128xf32>
    %c0_52 = arith.constant 0 : index
    %c0_53 = arith.constant 0 : index
    %157 = vector.load %arg9[%c0_52, %c0_53] : memref<1x128xf32, #tpu.memory_space<vmem>>, vector<1x128xf32>
    %158 = vector.broadcast %157 : vector<1x128xf32> to vector<32x128xf32>
    %159 = arith.addf %156, %158 : vector<32x128xf32>
    %160 = arith.addf %134, %159 : vector<32x128xf32>
    %c0_54 = arith.constant 0 : index
    %c0_55 = arith.constant 0 : index
    %161 = vector.load %arg12[%c0_54, %c0_55] : memref<1x128xf32, #tpu.memory_space<vmem>>, vector<1x128xf32>
    %c0_56 = arith.constant 0 : index
    %c0_57 = arith.constant 0 : index
    %162 = vector.load %arg13[%c0_56, %c0_57] : memref<1x128xf32, #tpu.memory_space<vmem>>, vector<1x128xf32>
    %cst_58 = arith.constant dense<0.000000e+00> : vector<32xf32>
    %163 = vector.multi_reduction <add>, %160, %cst_58 [1] : vector<32x128xf32> to vector<32xf32>
    %164 = vector.shape_cast %163 : vector<32xf32> to vector<32x1xf32>
    %cst_59 = arith.constant 1.280000e+02 : f32
    %165 = vector.broadcast %cst_59 : f32 to vector<32x1xf32>
    %166 = arith.divf %164, %165 : vector<32x1xf32>
    %167 = vector.broadcast %166 : vector<32x1xf32> to vector<32x128xf32>
    %168 = arith.subf %160, %167 : vector<32x128xf32>
    %169 = arith.mulf %168, %168 : vector<32x128xf32>
    %cst_60 = arith.constant dense<0.000000e+00> : vector<32xf32>
    %170 = vector.multi_reduction <add>, %169, %cst_60 [1] : vector<32x128xf32> to vector<32xf32>
    %171 = vector.shape_cast %170 : vector<32xf32> to vector<32x1xf32>
    %cst_61 = arith.constant 1.280000e+02 : f32
    %172 = vector.broadcast %cst_61 : f32 to vector<32x1xf32>
    %173 = arith.divf %171, %172 : vector<32x1xf32>
    %174 = vector.broadcast %166 : vector<32x1xf32> to vector<32x128xf32>
    %175 = arith.subf %160, %174 : vector<32x128xf32>
    %cst_62 = arith.constant 9.99999974E-6 : f32
    %176 = vector.broadcast %cst_62 : f32 to vector<32x1xf32>
    %177 = arith.addf %173, %176 : vector<32x1xf32>
    %178 = math.rsqrt %177 : vector<32x1xf32>
    %179 = vector.broadcast %178 : vector<32x1xf32> to vector<32x128xf32>
    %180 = arith.mulf %175, %179 : vector<32x128xf32>
    %181 = vector.broadcast %161 : vector<1x128xf32> to vector<32x128xf32>
    %182 = arith.mulf %180, %181 : vector<32x128xf32>
    %183 = vector.broadcast %162 : vector<1x128xf32> to vector<32x128xf32>
    %184 = arith.addf %182, %183 : vector<32x128xf32>
    %185 = vector.shape_cast %184 : vector<32x128xf32> to vector<2x16x128xf32>
    %c0_63 = arith.constant 0 : index
    %c0_64 = arith.constant 0 : index
    %c0_65 = arith.constant 0 : index
    %186 = vector.load %arg14[%c0_63, %c0_64, %c0_65] : memref<2x16x128xf32, #tpu.memory_space<vmem>>, vector<2x16x128xf32>
    tpu.vector_store %arg14[%c0_63, %c0_64, %c0_65], %185 {strides = array<i32>} : memref<2x16x128xf32, #tpu.memory_space<vmem>>, vector<2x16x128xf32>,
    return
  }
  func.func @transform_0(%arg0: i32) -> (i32, i32, i32) {
    %c0_i32 = arith.constant 0 : i32
    %c0_i32_0 = arith.constant 0 : i32
    %c0_i32_1 = arith.constant 0 : i32
    return %arg0, %c0_i32, %c0_i32_0 : i32, i32, i32
  }
  func.func @transform_1(%arg0: i32) -> (i32, i32) {
    %c0_i32 = arith.constant 0 : i32
    %c0_i32_0 = arith.constant 0 : i32
    %c0_i32_1 = arith.constant 0 : i32
    return %c0_i32, %c0_i32_0 : i32, i32
  }
  func.func @transform_2(%arg0: i32) -> (i32, i32) {
    %c0_i32 = arith.constant 0 : i32
    %c0_i32_0 = arith.constant 0 : i32
    %c0_i32_1 = arith.constant 0 : i32
    return %c0_i32, %c0_i32_0 : i32, i32
  }
  func.func @transform_3(%arg0: i32) -> (i32, i32) {
    %c0_i32 = arith.constant 0 : i32
    %c0_i32_0 = arith.constant 0 : i32
    %c0_i32_1 = arith.constant 0 : i32
    return %c0_i32, %c0_i32_0 : i32, i32
  }
  func.func @transform_4(%arg0: i32) -> (i32, i32) {
    %c0_i32 = arith.constant 0 : i32
    %c0_i32_0 = arith.constant 0 : i32
    %c0_i32_1 = arith.constant 0 : i32
    return %c0_i32, %c0_i32_0 : i32, i32
  }
  func.func @transform_5(%arg0: i32) -> (i32, i32) {
    %c0_i32 = arith.constant 0 : i32
    %c0_i32_0 = arith.constant 0 : i32
    %c0_i32_1 = arith.constant 0 : i32
    return %c0_i32, %c0_i32_0 : i32, i32
  }
  func.func @transform_6(%arg0: i32) -> (i32, i32) {
    %c0_i32 = arith.constant 0 : i32
    %c0_i32_0 = arith.constant 0 : i32
    %c0_i32_1 = arith.constant 0 : i32
    return %c0_i32, %c0_i32_0 : i32, i32
  }
  func.func @transform_7(%arg0: i32) -> (i32, i32) {
    %c0_i32 = arith.constant 0 : i32
    %c0_i32_0 = arith.constant 0 : i32
    %c0_i32_1 = arith.constant 0 : i32
    return %c0_i32, %c0_i32_0 : i32, i32
  }
  func.func @transform_8(%arg0: i32) -> (i32, i32) {
    %c0_i32 = arith.constant 0 : i32
    %c0_i32_0 = arith.constant 0 : i32
    %c0_i32_1 = arith.constant 0 : i32
    return %c0_i32, %c0_i32_0 : i32, i32
  }
  func.func @transform_9(%arg0: i32) -> (i32, i32) {
    %c0_i32 = arith.constant 0 : i32
    %c0_i32_0 = arith.constant 0 : i32
    %c0_i32_1 = arith.constant 0 : i32
    return %c0_i32, %c0_i32_0 : i32, i32
  }
  func.func @transform_10(%arg0: i32) -> (i32, i32) {
    %c0_i32 = arith.constant 0 : i32
    %c0_i32_0 = arith.constant 0 : i32
    %c0_i32_1 = arith.constant 0 : i32
    return %c0_i32, %c0_i32_0 : i32, i32
  }
  func.func @transform_11(%arg0: i32) -> (i32, i32) {
    %c0_i32 = arith.constant 0 : i32
    %c0_i32_0 = arith.constant 0 : i32
    %c0_i32_1 = arith.constant 0 : i32
    return %c0_i32, %c0_i32_0 : i32, i32
  }
  func.func @transform_12(%arg0: i32) -> (i32, i32) {
    %c0_i32 = arith.constant 0 : i32
    %c0_i32_0 = arith.constant 0 : i32
    %c0_i32_1 = arith.constant 0 : i32
    return %c0_i32, %c0_i32_0 : i32, i32
  }
  func.func @transform_13(%arg0: i32) -> (i32, i32, i32) {
    %c0_i32 = arith.constant 0 : i32
    %c0_i32_0 = arith.constant 0 : i32
    %c0_i32_1 = arith.constant 0 : i32
    return %arg0, %c0_i32, %c0_i32_0 : i32, i32, i32
  }
}

</mosaic_0001>

<llo_original>
// kernel: tpu_custom_call.1
$region0: #{tpu_custom_call.1}
  #allocation0 [shape = 'u32[]', space=smem, size = 0x4, offset = 0x4, fixed_abs, tag = 'smem constant byte address 0x4 - core index']
  #allocation1 [shape = 'u32[144,128]{1,0:T(1,128)}', space=vmem, size = 0x12000, scoped, tag = 'internal scratch']
  %s0 = inlined_call_operand.hbm [shape: f32[2,16,128], index: 0, kind: input, shape index: {}]
  %s1 = inlined_call_operand.hbm [shape: bf16[128,384], index: 1, kind: input, shape index: {}]
  %s2 = inlined_call_operand.hbm [shape: f32[1,384], index: 2, kind: input, shape index: {}]
  %s3 = inlined_call_operand.hbm [shape: bf16[128,128], index: 3, kind: input, shape index: {}]
  %s4 = inlined_call_operand.hbm [shape: f32[1,128], index: 4, kind: input, shape index: {}]
  %s5 = inlined_call_operand.hbm [shape: bf16[128,256], index: 5, kind: input, shape index: {}]
  %s6 = inlined_call_operand.hbm [shape: f32[1,256], index: 6, kind: input, shape index: {}]
  %s7 = inlined_call_operand.hbm [shape: bf16[256,128], index: 7, kind: input, shape index: {}]
  %s8 = inlined_call_operand.hbm [shape: f32[1,128], index: 8, kind: input, shape index: {}]
  %s9 = inlined_call_operand.hbm [shape: f32[1,128], index: 9, kind: input, shape index: {}]
  %s10 = inlined_call_operand.hbm [shape: f32[1,128], index: 10, kind: input, shape index: {}]
  %s11 = inlined_call_operand.hbm [shape: f32[1,128], index: 11, kind: input, shape index: {}]
  %s12 = inlined_call_operand.hbm [shape: f32[1,128], index: 12, kind: input, shape index: {}]
  %s13 = inlined_call_operand.hbm [shape: f32[2,16,128], index: 13, kind: output, shape index: {}]
  %s14 = sld [smem:[#allocation0]]
  $region114: #{tpu_custom_call.1} parent=0
    _
  %s16 = ssub.s32 1, %s14
  %s17 = scalar_select 0, %s16, %s14
  $region1: #{tpu_custom_call.1} parent=0
    #allocation2 [shape = 'u8[16384]{0}', space=vmem, size = 0x4000, scoped, tag = 'input window, operand 0, single buffered']
    #allocation3 [shape = 's32[1]{0}', space=sflag, size = 0x4, scoped, tag = 'scoped memory for tpu_custom_call.1']
    #allocation4 [shape = 's32[1]{0}', space=sflag, size = 0x4, scoped, tag = 'scoped memory for tpu_custom_call.1']
    #allocation5 [shape = 'u8[98304]{0}', space=vmem, size = 0x18000, scoped, tag = 'input window, operand 1, single buffered']
    #allocation6 [shape = 's32[1]{0}', space=sflag, size = 0x4, scoped, tag = 'scoped memory for tpu_custom_call.1']
    #allocation7 [shape = 'u8[1536]{0}', space=vmem, size = 0x800, scoped, tag = 'input window, operand 2, single buffered']
    #allocation8 [shape = 'u8[32768]{0}', space=vmem, size = 0x8000, scoped, tag = 'input window, operand 3, single buffered']
    #allocation9 [shape = 's32[1]{0}', space=sflag, size = 0x4, scoped, tag = 'scoped memory for tpu_custom_call.1']
    #allocation10 [shape = 'u8[512]{0}', space=vmem, size = 0x400, scoped, tag = 'input window, operand 4, single buffered']
    #allocation11 [shape = 'u8[65536]{0}', space=vmem, size = 0x10000, scoped, tag = 'input window, operand 5, single buffered']
    #allocation12 [shape = 's32[1]{0}', space=sflag, size = 0x4, scoped, tag = 'scoped memory for tpu_custom_call.1']
    #allocation13 [shape = 'u8[1024]{0}', space=vmem, size = 0x400, scoped, tag = 'input window, operand 6, single buffered']
    #allocation14 [shape = 'u8[65536]{0}', space=vmem, size = 0x10000, scoped, tag = 'input window, operand 7, single buffered']
    #allocation15 [shape = 's32[1]{0}', space=sflag, size = 0x4, scoped, tag = 'scoped memory for tpu_custom_call.1']
    #allocation16 [shape = 'u8[512]{0}', space=vmem, size = 0x400, scoped, tag = 'input window, operand 8, single buffered']
    #allocation17 [shape = 'u8[512]{0}', space=vmem, size = 0x400, scoped, tag = 'input window, operand 9, single buffered']
    #allocation18 [shape = 's32[1]{0}', space=sflag, size = 0x4, scoped, tag = 'scoped memory for tpu_custom_call.1']
    #allocation19 [shape = 'u8[512]{0}', space=vmem, size = 0x400, scoped, tag = 'input window, operand 10, single buffered']
    #allocation20 [shape = 'u8[512]{0}', space=vmem, size = 0x400, scoped, tag = 'input window, operand 11, single buffered']
    #allocation21 [shape = 's32[1]{0}', space=sflag, size = 0x4, scoped, tag = 'scoped memory for tpu_custom_call.1']
    #allocation22 [shape = 'u8[512]{0}', space=vmem, size = 0x400, scoped, tag = 'input window, operand 12, single buffered']
    #allocation23 [shape = 'u8[16384]{0}', space=vmem, size = 0x4000, scoped, tag = 'output window, operand 0, single buffered']
    %18 = vsyncpa [#allocation3], 0
    %19 = vsyncpa [#allocation6], 0
    %20 = vsyncpa [#allocation9], 0
    %21 = vsyncpa [#allocation12], 0
    %22 = vsyncpa [#allocation15], 0
    %23 = vsyncpa [#allocation18], 0
    %24 = vsyncpa [#allocation21], 0
    %25 = vsyncpa [#allocation4], 0
    // Predicated region
    $region2: #{tpu_custom_call.1} parent=1 // pred_check
      _
    $region3: #{tpu_custom_call.1} parent=1 // pred_check_branch
      %27 = sbr.rel (0) target = $region5
    $region4: #{tpu_custom_call.1} parent=1 // pred_region
      %s29 = ssub.s32 512, 512
      %30 = vsyncadd [#allocation3], %s29
      %s31 = sshll.u32 [#allocation2], 4
      %s32 = int_to_ptr.vmem [resolvable:$true] %s31
      %37 = dma.hbm_to_vmem [thread:$0]  %s0, 512, %s32, [#allocation3], 128, 128, 8
    $region5: #{tpu_custom_call.1} parent=1 // pred_fallthru
      _
    // Predicated region
    $region6: #{tpu_custom_call.1} parent=1 // pred_check
      _
    $region7: #{tpu_custom_call.1} parent=1 // pred_check_branch
      %39 = sbr.rel (0) target = $region9
    $region8: #{tpu_custom_call.1} parent=1 // pred_region
      %s41 = ssub.s32 3072, 3072
      %42 = vsyncadd [#allocation6], %s41
      %s43 = sshll.u32 [#allocation5], 4
      %s44 = int_to_ptr.vmem [resolvable:$true] %s43
      %49 = dma.hbm_to_vmem [thread:$0]  %s1, 3072, %s44, [#allocation6], 192, 192, 12
    $region9: #{tpu_custom_call.1} parent=1 // pred_fallthru
      _
    // Predicated region
    $region10: #{tpu_custom_call.1} parent=1 // pred_check
      _
    $region11: #{tpu_custom_call.1} parent=1 // pred_check_branch
      %51 = sbr.rel (0) target = $region13
    $region12: #{tpu_custom_call.1} parent=1 // pred_region
      %s53 = ssub.s32 48, 48
      %54 = vsyncadd [#allocation6], %s53
      %s56 = sshll.u32 [#allocation7], 4
      %s57 = int_to_ptr.vmem [resolvable:$true] %s56
      %59 = dma.hbm_to_vmem [thread:$0]  %s2, 48, %s57, [#allocation6]
    $region13: #{tpu_custom_call.1} parent=1 // pred_fallthru
      _
    // Predicated region
    $region14: #{tpu_custom_call.1} parent=1 // pred_check
      _
    $region15: #{tpu_custom_call.1} parent=1 // pred_check_branch
      %61 = sbr.rel (0) target = $region17
    $region16: #{tpu_custom_call.1} parent=1 // pred_region
      %s63 = ssub.s32 1024, 1024
      %64 = vsyncadd [#allocation9], %s63
      %s65 = sshll.u32 [#allocation8], 4
      %s66 = int_to_ptr.vmem [resolvable:$true] %s65
      %71 = dma.hbm_to_vmem [thread:$0]  %s3, 1024, %s66, [#allocation9], 64, 64, 4
    $region17: #{tpu_custom_call.1} parent=1 // pred_fallthru
      _
    // Predicated region
    $region18: #{tpu_custom_call.1} parent=1 // pred_check
      _
    $region19: #{tpu_custom_call.1} parent=1 // pred_check_branch
      %73 = sbr.rel (0) target = $region21
    $region20: #{tpu_custom_call.1} parent=1 // pred_region
      %s75 = ssub.s32 16, 16
      %76 = vsyncadd [#allocation9], %s75
      %s78 = sshll.u32 [#allocation10], 4
      %s79 = int_to_ptr.vmem [resolvable:$true] %s78
      %81 = dma.hbm_to_vmem [thread:$0]  %s4, 16, %s79, [#allocation9]
    $region21: #{tpu_custom_call.1} parent=1 // pred_fallthru
      _
    // Predicated region
    $region22: #{tpu_custom_call.1} parent=1 // pred_check
      _
    $region23: #{tpu_custom_call.1} parent=1 // pred_check_branch
      %83 = sbr.rel (0) target = $region25
    $region24: #{tpu_custom_call.1} parent=1 // pred_region
      %s85 = ssub.s32 2048, 2048
      %86 = vsyncadd [#allocation12], %s85
      %s87 = sshll.u32 [#allocation11], 4
      %s88 = int_to_ptr.vmem [resolvable:$true] %s87
      %93 = dma.hbm_to_vmem [thread:$0]  %s5, 2048, %s88, [#allocation12], 128, 128, 8
    $region25: #{tpu_custom_call.1} parent=1 // pred_fallthru
      _
    // Predicated region
    $region26: #{tpu_custom_call.1} parent=1 // pred_check
      _
    $region27: #{tpu_custom_call.1} parent=1 // pred_check_branch
      %95 = sbr.rel (0) target = $region29
    $region28: #{tpu_custom_call.1} parent=1 // pred_region
      %s97 = ssub.s32 32, 32
      %98 = vsyncadd [#allocation12], %s97
      %s100 = sshll.u32 [#allocation13], 4
      %s101 = int_to_ptr.vmem [resolvable:$true] %s100
      %103 = dma.hbm_to_vmem [thread:$0]  %s6, 32, %s101, [#allocation12]
    $region29: #{tpu_custom_call.1} parent=1 // pred_fallthru
      _
    // Predicated region
    $region30: #{tpu_custom_call.1} parent=1 // pred_check
      _
    $region31: #{tpu_custom_call.1} parent=1 // pred_check_branch
      %105 = sbr.rel (0) target = $region33
    $region32: #{tpu_custom_call.1} parent=1 // pred_region
      %s107 = ssub.s32 2048, 2048
      %108 = vsyncadd [#allocation15], %s107
      %s109 = sshll.u32 [#allocation14], 4
      %s110 = int_to_ptr.vmem [resolvable:$true] %s109
      %115 = dma.hbm_to_vmem [thread:$0]  %s7, 2048, %s110, [#allocation15], 64, 64, 4
    $region33: #{tpu_custom_call.1} parent=1 // pred_fallthru
      _
    // Predicated region
    $region34: #{tpu_custom_call.1} parent=1 // pred_check
      _
    $region35: #{tpu_custom_call.1} parent=1 // pred_check_branch
      %117 = sbr.rel (0) target = $region37
    $region36: #{tpu_custom_call.1} parent=1 // pred_region
      %s119 = ssub.s32 16, 16
      %120 = vsyncadd [#allocation15], %s119
      %s122 = sshll.u32 [#allocation16], 4
      %s123 = int_to_ptr.vmem [resolvable:$true] %s122
      %125 = dma.hbm_to_vmem [thread:$0]  %s8, 16, %s123, [#allocation15]
    $region37: #{tpu_custom_call.1} parent=1 // pred_fallthru
      _
    // Predicated region
    $region38: #{tpu_custom_call.1} parent=1 // pred_check
      _
    $region39: #{tpu_custom_call.1} parent=1 // pred_check_branch
      %127 = sbr.rel (0) target = $region41
    $region40: #{tpu_custom_call.1} parent=1 // pred_region
      %s129 = ssub.s32 16, 16
      %130 = vsyncadd [#allocation18], %s129
      %s132 = sshll.u32 [#allocation17], 4
      %s133 = int_to_ptr.vmem [resolvable:$true] %s132
      %135 = dma.hbm_to_vmem [thread:$0]  %s9, 16, %s133, [#allocation18]
    $region41: #{tpu_custom_call.1} parent=1 // pred_fallthru
      _
    // Predicated region
    $region42: #{tpu_custom_call.1} parent=1 // pred_check
      _
    $region43: #{tpu_custom_call.1} parent=1 // pred_check_branch
      %137 = sbr.rel (0) target = $region45
    $region44: #{tpu_custom_call.1} parent=1 // pred_region
      %s139 = ssub.s32 16, 16
      %140 = vsyncadd [#allocation18], %s139
      %s142 = sshll.u32 [#allocation19], 4
      %s143 = int_to_ptr.vmem [resolvable:$true] %s142
      %145 = dma.hbm_to_vmem [thread:$0]  %s10, 16, %s143, [#allocation18]
    $region45: #{tpu_custom_call.1} parent=1 // pred_fallthru
      _
    // Predicated region
    $region46: #{tpu_custom_call.1} parent=1 // pred_check
      _
    $region47: #{tpu_custom_call.1} parent=1 // pred_check_branch
      %147 = sbr.rel (0) target = $region49
    $region48: #{tpu_custom_call.1} parent=1 // pred_region
      %s149 = ssub.s32 16, 16
      %150 = vsyncadd [#allocation21], %s149
      %s152 = sshll.u32 [#allocation20], 4
      %s153 = int_to_ptr.vmem [resolvable:$true] %s152
      %155 = dma.hbm_to_vmem [thread:$0]  %s11, 16, %s153, [#allocation21]
    $region49: #{tpu_custom_call.1} parent=1 // pred_fallthru
      _
    // Predicated region
    $region50: #{tpu_custom_call.1} parent=1 // pred_check
      _
    $region51: #{tpu_custom_call.1} parent=1 // pred_check_branch
      %157 = sbr.rel (0) target = $region53
    $region52: #{tpu_custom_call.1} parent=1 // pred_region
      %s159 = ssub.s32 16, 16
      %160 = vsyncadd [#allocation21], %s159
      %s162 = sshll.u32 [#allocation22], 4
      %s163 = int_to_ptr.vmem [resolvable:$true] %s162
      %165 = dma.hbm_to_vmem [thread:$0]  %s12, 16, %s163, [#allocation21]
    $region53: #{tpu_custom_call.1} parent=1 // pred_fallthru
      _
    // Predicated region
    $region54: #{tpu_custom_call.1} parent=1 // pred_check
      _
    $region55: #{tpu_custom_call.1} parent=1 // pred_check_branch
      %167 = sbr.rel (0) target = $region57
    $region56: #{tpu_custom_call.1} parent=1 // pred_region
      %168 = dma.done [#allocation3], 512
    $region57: #{tpu_custom_call.1} parent=1 // pred_fallthru
      _
    // Predicated region
    $region58: #{tpu_custom_call.1} parent=1 // pred_check
      _
    $region59: #{tpu_custom_call.1} parent=1 // pred_check_branch
      %170 = sbr.rel (0) target = $region61
    $region60: #{tpu_custom_call.1} parent=1 // pred_region
      %171 = dma.done [#allocation6], 3072
    $region61: #{tpu_custom_call.1} parent=1 // pred_fallthru
      _
    // Predicated region
    $region62: #{tpu_custom_call.1} parent=1 // pred_check
      _
    $region63: #{tpu_custom_call.1} parent=1 // pred_check_branch
      %173 = sbr.rel (0) target = $region65
    $region64: #{tpu_custom_call.1} parent=1 // pred_region
      %174 = dma.done [#allocation6], 48
    $region65: #{tpu_custom_call.1} parent=1 // pred_fallthru
      _
    // Predicated region
    $region66: #{tpu_custom_call.1} parent=1 // pred_check
      _
    $region67: #{tpu_custom_call.1} parent=1 // pred_check_branch
      %176 = sbr.rel (0) target = $region69
    $region68: #{tpu_custom_call.1} parent=1 // pred_region
      %177 = dma.done [#allocation9], 1024
    $region69: #{tpu_custom_call.1} parent=1 // pred_fallthru
      _
    // Predicated region
    $region70: #{tpu_custom_call.1} parent=1 // pred_check
      _
    $region71: #{tpu_custom_call.1} parent=1 // pred_check_branch
      %179 = sbr.rel (0) target = $region73
    $region72: #{tpu_custom_call.1} parent=1 // pred_region
      %180 = dma.done [#allocation9], 16
    $region73: #{tpu_custom_call.1} parent=1 // pred_fallthru
      _
    // Predicated region
    $region74: #{tpu_custom_call.1} parent=1 // pred_check
      _
    $region75: #{tpu_custom_call.1} parent=1 // pred_check_branch
      %182 = sbr.rel (0) target = $region77
    $region76: #{tpu_custom_call.1} parent=1 // pred_region
      %183 = dma.done [#allocation12], 2048
    $region77: #{tpu_custom_call.1} parent=1 // pred_fallthru
      _
    // Predicated region
    $region78: #{tpu_custom_call.1} parent=1 // pred_check
      _
    $region79: #{tpu_custom_call.1} parent=1 // pred_check_branch
      %185 = sbr.rel (0) target = $region81
    $region80: #{tpu_custom_call.1} parent=1 // pred_region
      %186 = dma.done [#allocation12], 32
    $region81: #{tpu_custom_call.1} parent=1 // pred_fallthru
      _
    // Predicated region
    $region82: #{tpu_custom_call.1} parent=1 // pred_check
      _
    $region83: #{tpu_custom_call.1} parent=1 // pred_check_branch
      %188 = sbr.rel (0) target = $region85
    $region84: #{tpu_custom_call.1} parent=1 // pred_region
      %189 = dma.done [#allocation15], 2048
    $region85: #{tpu_custom_call.1} parent=1 // pred_fallthru
      _
    // Predicated region
    $region86: #{tpu_custom_call.1} parent=1 // pred_check
      _
    $region87: #{tpu_custom_call.1} parent=1 // pred_check_branch
      %191 = sbr.rel (0) target = $region89
    $region88: #{tpu_custom_call.1} parent=1 // pred_region
      %192 = dma.done [#allocation15], 16
    $region89: #{tpu_custom_call.1} parent=1 // pred_fallthru
      _
    // Predicated region
    $region90: #{tpu_custom_call.1} parent=1 // pred_check
      _
    $region91: #{tpu_custom_call.1} parent=1 // pred_check_branch
      %194 = sbr.rel (0) target = $region93
    $region92: #{tpu_custom_call.1} parent=1 // pred_region
      %195 = dma.done [#allocation18], 16
    $region93: #{tpu_custom_call.1} parent=1 // pred_fallthru
      _
    // Predicated region
    $region94: #{tpu_custom_call.1} parent=1 // pred_check
      _
    $region95: #{tpu_custom_call.1} parent=1 // pred_check_branch
      %197 = sbr.rel (0) target = $region97
    $region96: #{tpu_custom_call.1} parent=1 // pred_region
      %198 = dma.done [#allocation18], 16
    $region97: #{tpu_custom_call.1} parent=1 // pred_fallthru
      _
    // Predicated region
    $region98: #{tpu_custom_call.1} parent=1 // pred_check
      _
    $region99: #{tpu_custom_call.1} parent=1 // pred_check_branch
      %200 = sbr.rel (0) target = $region101
    $region100: #{tpu_custom_call.1} parent=1 // pred_region
      %201 = dma.done [#allocation21], 16
    $region101: #{tpu_custom_call.1} parent=1 // pred_fallthru
      _
    // Predicated region
    $region102: #{tpu_custom_call.1} parent=1 // pred_check
      _
    $region103: #{tpu_custom_call.1} parent=1 // pred_check_branch
      %203 = sbr.rel (0) target = $region105
    $region104: #{tpu_custom_call.1} parent=1 // pred_region
      %204 = dma.done [#allocation21], 16
    $region105: #{tpu_custom_call.1} parent=1 // pred_fallthru
      _
    %v206 = vld [vmem:[#allocation2] sm:$0xff]
    %v207 = vld [vmem:[#allocation2 + $0x8] sm:$0xff]
    %v208 = vld [vmem:[#allocation2 + $0x10] sm:$0xff]
    %v209 = vld [vmem:[#allocation2 + $0x18] sm:$0xff]
    %v210 = vpack.c.bf16 %v207, %v206
    %v211 = vpack.c.bf16 %v209, %v208
    %v212 = vld [vmem:[#allocation5] sm:$0xff]
    %v213 = vld [vmem:[#allocation5 + $0x8] sm:$0xf]
    %v214 = vld [vmem:[#allocation5 + $0xc] sm:$0xff]
    %v215 = vld [vmem:[#allocation5 + $0x14] sm:$0xf]
    %v216 = vld [vmem:[#allocation5 + $0x18] sm:$0xff]
    %v217 = vld [vmem:[#allocation5 + $0x20] sm:$0xf]
    %v218 = vld [vmem:[#allocation5 + $0x24] sm:$0xff]
    %v219 = vld [vmem:[#allocation5 + $0x2c] sm:$0xf]
    %v220 = vld [vmem:[#allocation5 + $0x30] sm:$0xff]
    %v221 = vld [vmem:[#allocation5 + $0x38] sm:$0xf]
    %v222 = vld [vmem:[#allocation5 + $0x3c] sm:$0xff]
    %v223 = vld [vmem:[#allocation5 + $0x44] sm:$0xf]
    %v224 = vld [vmem:[#allocation5 + $0x48] sm:$0xff]
    %v225 = vld [vmem:[#allocation5 + $0x50] sm:$0xf]
    %v226 = vld [vmem:[#allocation5 + $0x54] sm:$0xff]
    %v227 = vld [vmem:[#allocation5 + $0x5c] sm:$0xf]
    %v228 = vld [vmem:[#allocation5 + $0x60] sm:$0xff]
    %v229 = vld [vmem:[#allocation5 + $0x68] sm:$0xf]
    %v230 = vld [vmem:[#allocation5 + $0x6c] sm:$0xff]
    %v231 = vld [vmem:[#allocation5 + $0x74] sm:$0xf]
    %v232 = vld [vmem:[#allocation5 + $0x78] sm:$0xff]
    %v233 = vld [vmem:[#allocation5 + $0x80] sm:$0xf]
    %v234 = vld [vmem:[#allocation5 + $0x84] sm:$0xff]
    %v235 = vld [vmem:[#allocation5 + $0x8c] sm:$0xf]
    %v236 = vld [vmem:[#allocation5 + $0x90] sm:$0xff]
    %v237 = vld [vmem:[#allocation5 + $0x98] sm:$0xf]
    %v238 = vld [vmem:[#allocation5 + $0x9c] sm:$0xff]
    %v239 = vld [vmem:[#allocation5 + $0xa4] sm:$0xf]
    %v240 = vld [vmem:[#allocation5 + $0xa8] sm:$0xff]
    %v241 = vld [vmem:[#allocation5 + $0xb0] sm:$0xf]
    %v242 = vld [vmem:[#allocation5 + $0xb4] sm:$0xff]
    %v243 = vld [vmem:[#allocation5 + $0xbc] sm:$0xf]
    %v244 = vld [vmem:[#allocation7] sm:$0x7]
    %v246 = vlaneseq
    %v247 = vshrl.u32 %v246, 7
    %v248 = vsub.s32 0, %v247
    %v249 = vrot.slane %v244, %v248
    %v250 = vlaneseq
    %v251 = vshrl.u32 %v250, 7
    %v252 = vsub.s32 1, %v251
    %v253 = vrot.slane %v244, %v252
    %v254 = vlaneseq
    %v255 = vshrl.u32 %v254, 7
    %v256 = vsub.s32 2, %v255
    %v257 = vrot.slane %v244, %v256
    %v293 = vunpack.c.l.b16 %v212
    %v294 = vunpack.c.h.b16 %v212
    %v295 = vunpack.c.l.b16 %v213
    %v296 = vunpack.c.l.b16 %v214
    %v297 = vunpack.c.h.b16 %v214
    %v298 = vunpack.c.l.b16 %v215
    %v299 = vunpack.c.l.b16 %v216
    %v300 = vunpack.c.h.b16 %v216
    %v301 = vunpack.c.l.b16 %v217
    %v302 = vunpack.c.l.b16 %v218
    %v303 = vunpack.c.h.b16 %v218
    %v304 = vunpack.c.l.b16 %v219
    %v305 = vunpack.c.l.b16 %v220
    %v306 = vunpack.c.h.b16 %v220
    %v307 = vunpack.c.l.b16 %v221
    %v308 = vunpack.c.l.b16 %v222
    %v309 = vunpack.c.h.b16 %v222
    %v310 = vunpack.c.l.b16 %v223
    %v311 = vunpack.c.l.b16 %v224
    %v312 = vunpack.c.h.b16 %v224
    %v313 = vunpack.c.l.b16 %v225
    %v314 = vunpack.c.l.b16 %v226
    %v315 = vunpack.c.h.b16 %v226
    %v316 = vunpack.c.l.b16 %v227
    %v317 = vunpack.c.l.b16 %v228
    %v318 = vunpack.c.h.b16 %v228
    %v319 = vunpack.c.l.b16 %v229
    %v320 = vunpack.c.l.b16 %v230
    %v321 = vunpack.c.h.b16 %v230
    %v322 = vunpack.c.l.b16 %v231
    %v323 = vunpack.c.l.b16 %v232
    %v324 = vunpack.c.h.b16 %v232
    %v325 = vunpack.c.l.b16 %v233
    %v326 = vunpack.c.l.b16 %v234
    %v327 = vunpack.c.h.b16 %v234
    %v328 = vunpack.c.l.b16 %v235
    %v329 = vunpack.c.l.b16 %v236
    %v330 = vunpack.c.h.b16 %v236
    %v331 = vunpack.c.l.b16 %v237
    %v332 = vunpack.c.l.b16 %v238
    %v333 = vunpack.c.h.b16 %v238
    %v334 = vunpack.c.l.b16 %v239
    %v335 = vunpack.c.l.b16 %v240
    %v336 = vunpack.c.h.b16 %v240
    %v337 = vunpack.c.l.b16 %v241
    %v338 = vunpack.c.l.b16 %v242
    %v339 = vunpack.c.h.b16 %v242
    %v340 = vunpack.c.l.b16 %v243
    %v341 = vpack.c.b16 %v296, %v293
    %v342 = vpack.c.b16 %v297, %v294
    %v343 = vpack.c.b16 %v298, %v295
    %v344 = vpack.c.b16 %v302, %v299
    %v345 = vpack.c.b16 %v303, %v300
    %v346 = vpack.c.b16 %v304, %v301
    %v347 = vpack.c.b16 %v308, %v305
    %v348 = vpack.c.b16 %v309, %v306
    %v349 = vpack.c.b16 %v310, %v307
    %v350 = vpack.c.b16 %v314, %v311
    %v351 = vpack.c.b16 %v315, %v312
    %v352 = vpack.c.b16 %v316, %v313
    %v353 = vpack.c.b16 %v320, %v317
    %v354 = vpack.c.b16 %v321, %v318
    %v355 = vpack.c.b16 %v322, %v319
    %v356 = vpack.c.b16 %v326, %v323
    %v357 = vpack.c.b16 %v327, %v324
    %v358 = vpack.c.b16 %v328, %v325
    %v359 = vpack.c.b16 %v332, %v329
    %v360 = vpack.c.b16 %v333, %v330
    %v361 = vpack.c.b16 %v334, %v331
    %v362 = vpack.c.b16 %v338, %v335
    %v363 = vpack.c.b16 %v339, %v336
    %v364 = vpack.c.b16 %v340, %v337
    %389 = vmatprep.subr.bf16.mxu0 %v342
    %390 = vmatpush1.bf16.msra.mxu0 %v341
    %391 = vmatprep.subr.bf16.mxu0 %v345
    %392 = vmatpush1.bf16.msra.mxu0 %v344
    %393 = vmatprep.subr.bf16.mxu0 %v348
    %394 = vmatpush1.bf16.msra.mxu0 %v347
    %395 = vmatprep.subr.bf16.mxu0 %v351
    %396 = vmatpush1.bf16.msra.mxu0 %v350
    %397 = vmatprep.subr.bf16.mxu0 %v354
    %398 = vmatpush1.bf16.msra.mxu0 %v353
    %399 = vmatprep.subr.bf16.mxu0 %v357
    %400 = vmatpush1.bf16.msra.mxu0 %v356
    %401 = vmatprep.subr.bf16.mxu0 %v360
    %402 = vmatpush1.bf16.msra.mxu0 %v359
    %403 = vmatprep.subr.bf16.mxu0 %v363
    %404 = vmatpush1.bf16.msra.mxu0 %v362
    %405 = vmatprep.subr.bf16.mxu0 0
    %406 = vmatpush1.bf16.msra.mxu0 0
    %407 = vmatprep.subr.bf16.mxu0 0
    %408 = vmatpush1.bf16.msra.mxu0 0
    %409 = vmatprep.subr.bf16.mxu0 0
    %410 = vmatpush1.bf16.msra.mxu0 0
    %411 = vmatprep.subr.bf16.mxu0 0
    %412 = vmatpush1.bf16.msra.mxu0 0
    %413 = vmatprep.subr.bf16.mxu0 0
    %414 = vmatpush1.bf16.msra.mxu0 0
    %415 = vmatprep.subr.bf16.mxu0 0
    %416 = vmatpush1.bf16.msra.mxu0 0
    %417 = vmatprep.subr.bf16.mxu0 0
    %418 = vmatpush1.bf16.msra.mxu0 0
    %419 = vmatprep.subr.bf16.mxu0 0
    %420 = vmatpush1.bf16.msra.mxu0 0
    %421 = vmatprep.mubr.bf16.mxu0 0
    %422 = vmatmul.mubr.bf16.gmra.mrb[0].mxu0 %v210
    %v423 = vpop.f32.mrb[0].mxu0
    %v424 = vadd.f32 %v249, %v423
    %v425 = vpop.f32.mrb[0].mxu0
    %v426 = vadd.f32 %v253, %v425
    %v427 = vpop.f32.mrb[0].mxu0
    %v428 = vadd.f32 %v249, %v427
    %v429 = vpop.f32.mrb[0].mxu0
    %v430 = vadd.f32 %v253, %v429
    %431 = vmatprep.mubr.bf16.mxu0 0
    %432 = vmatmul.mubr.bf16.gmra.mrb[0].mxu0 %v211
    %v433 = vpop.f32.mrb[0].mxu0
    %v434 = vadd.f32 %v249, %v433
    %v435 = vpop.f32.mrb[0].mxu0
    %v436 = vadd.f32 %v253, %v435
    %v437 = vpop.f32.mrb[0].mxu0
    %v438 = vadd.f32 %v249, %v437
    %v439 = vpop.f32.mrb[0].mxu0
    %v440 = vadd.f32 %v253, %v439
    %441 = vdwg.mxu0
    %442 = vmatprep.subr.bf16.mxu0 0
    %443 = vmatpush1.bf16.msra.mxu0 %v343
    %444 = vmatprep.subr.bf16.mxu0 0
    %445 = vmatpush1.bf16.msra.mxu0 %v346
    %446 = vmatprep.subr.bf16.mxu0 0
    %447 = vmatpush1.bf16.msra.mxu0 %v349
    %448 = vmatprep.subr.bf16.mxu0 0
    %449 = vmatpush1.bf16.msra.mxu0 %v352
    %450 = vmatprep.subr.bf16.mxu0 0
    %451 = vmatpush1.bf16.msra.mxu0 %v355
    %452 = vmatprep.subr.bf16.mxu0 0
    %453 = vmatpush1.bf16.msra.mxu0 %v358
    %454 = vmatprep.subr.bf16.mxu0 0
    %455 = vmatpush1.bf16.msra.mxu0 %v361
    %456 = vmatprep.subr.bf16.mxu0 0
    %457 = vmatpush1.bf16.msra.mxu0 %v364
    %458 = vmatprep.subr.bf16.mxu0 0
    %459 = vmatpush1.bf16.msra.mxu0 0
    %460 = vmatprep.subr.bf16.mxu0 0
    %461 = vmatpush1.bf16.msra.mxu0 0
    %462 = vmatprep.subr.bf16.mxu0 0
    %463 = vmatpush1.bf16.msra.mxu0 0
    %464 = vmatprep.subr.bf16.mxu0 0
    %465 = vmatpush1.bf16.msra.mxu0 0
    %466 = vmatprep.subr.bf16.mxu0 0
    %467 = vmatpush1.bf16.msra.mxu0 0
    %468 = vmatprep.subr.bf16.mxu0 0
    %469 = vmatpush1.bf16.msra.mxu0 0
    %470 = vmatprep.subr.bf16.mxu0 0
    %471 = vmatpush1.bf16.msra.mxu0 0
    %472 = vmatprep.subr.bf16.mxu0 0
    %473 = vmatpush1.bf16.msra.mxu0 0
    %474 = vmatprep.mubr.bf16.mxu0 0
    %475 = vmatmul.mubr.bf16.gmra.mrb[0].mxu0 %v210
    %v476 = vpop.f32.mrb[0].mxu0
    %v477 = vadd.f32 %v257, %v476
    %v478 = vpop.f32.mrb[0].mxu0
    %v479 = vpop.f32.mrb[0].mxu0
    %v480 = vadd.f32 %v257, %v479
    %v481 = vpop.f32.mrb[0].mxu0
    %482 = vmatprep.mubr.bf16.mxu0 0
    %483 = vmatmul.mubr.bf16.gmra.mrb[0].mxu0 %v211
    %v484 = vpop.f32.mrb[0].mxu0
    %v485 = vadd.f32 %v257, %v484
    %v486 = vpop.f32.mrb[0].mxu0
    %v487 = vpop.f32.mrb[0].mxu0
    %v488 = vadd.f32 %v257, %v487
    %v489 = vpop.f32.mrb[0].mxu0
    %490 = vdwg.mxu0
    %v491 = vpack.c.bf16 %v428, %v424
    %v492 = vpack.c.bf16 %v430, %v426
    %v493 = vpack.c.bf16 %v480, %v477
    %v494 = vpack.c.bf16 %v438, %v434
    %v495 = vpack.c.bf16 %v440, %v436
    %v496 = vpack.c.bf16 %v488, %v485
    %v497 = vld [vmem:[#allocation8] sm:$0xf]
    %v498 = vld [vmem:[#allocation8 + $0x4] sm:$0xf]
    %v499 = vld [vmem:[#allocation8 + $0x8] sm:$0xf]
    %v500 = vld [vmem:[#allocation8 + $0xc] sm:$0xf]
    %v501 = vld [vmem:[#allocation8 + $0x10] sm:$0xf]
    %v502 = vld [vmem:[#allocation8 + $0x14] sm:$0xf]
    %v503 = vld [vmem:[#allocation8 + $0x18] sm:$0xf]
    %v504 = vld [vmem:[#allocation8 + $0x1c] sm:$0xf]
    %v505 = vld [vmem:[#allocation8 + $0x20] sm:$0xf]
    %v506 = vld [vmem:[#allocation8 + $0x24] sm:$0xf]
    %v507 = vld [vmem:[#allocation8 + $0x28] sm:$0xf]
    %v508 = vld [vmem:[#allocation8 + $0x2c] sm:$0xf]
    %v509 = vld [vmem:[#allocation8 + $0x30] sm:$0xf]
    %v510 = vld [vmem:[#allocation8 + $0x34] sm:$0xf]
    %v511 = vld [vmem:[#allocation8 + $0x38] sm:$0xf]
    %v512 = vld [vmem:[#allocation8 + $0x3c] sm:$0xf]
    %vm513 = vcmask 261120
    %v515 = vsel %vm513, %v491, 0
    %v518 = vsel %vm513, %v492, 0
    %520 = vmatprep.subr.bf16.mxu0 0
    %521 = vmatpush1.bf16.xpose.msra.mxu0 %v518
    %522 = vmatprep.subr.bf16.mxu0 0
    %523 = vmatpush1.bf16.xpose.msra.mxu0 0
    %524 = vmatprep.subr.bf16.mxu0 0
    %525 = vmatpush1.bf16.xpose.msra.mxu0 0
    %526 = vmatprep.subr.bf16.mxu0 0
    %527 = vmatpush1.bf16.xpose.msra.mxu0 0
    %528 = vmatprep.subr.bf16.mxu0 0
    %529 = vmatpush1.bf16.xpose.msra.mxu0 0
    %530 = vmatprep.subr.bf16.mxu0 0
    %531 = vmatpush1.bf16.xpose.msra.mxu0 0
    %532 = vmatprep.subr.bf16.mxu0 0
    %533 = vmatpush1.bf16.xpose.msra.mxu0 0
    %534 = vmatprep.subr.bf16.mxu0 0
    %535 = vmatpush1.bf16.xpose.msra.mxu0 0
    %536 = vmatprep.subr.bf16.mxu0 0
    %537 = vmatpush1.bf16.xpose.msra.mxu0 0
    %538 = vmatprep.subr.bf16.mxu0 0
    %539 = vmatpush1.bf16.xpose.msra.mxu0 0
    %540 = vmatprep.subr.bf16.mxu0 0
    %541 = vmatpush1.bf16.xpose.msra.mxu0 0
    %542 = vmatprep.subr.bf16.mxu0 0
    %543 = vmatpush1.bf16.xpose.msra.mxu0 0
    %544 = vmatprep.subr.bf16.mxu0 0
    %545 = vmatpush1.bf16.xpose.msra.mxu0 0
    %546 = vmatprep.subr.bf16.mxu0 0
    %547 = vmatpush1.bf16.xpose.msra.mxu0 0
    %548 = vmatprep.subr.bf16.mxu0 0
    %549 = vmatpush1.bf16.xpose.msra.mxu0 0
    %550 = vmatprep.subr.bf16.mxu0 0
    %551 = vmatpush1.bf16.xpose.msra.mxu0 0
    %552 = vmatprep.mubr.bf16.mxu0 0
    %553 = vmatmul.mubr.bf16.gmra.mrb[0].mxu0 %v515
    %v554 = vpop.f32.mrb[0].mxu0
    %v555 = vadd.f32 0.0, %v554
    %v556 = vpop.f32.mrb[0].mxu0
    %v557 = vpop.f32.mrb[0].mxu0
    %v558 = vadd.f32 0.0, %v557
    %v559 = vpop.f32.mrb[0].mxu0
    %560 = vdwg.mxu0
    %v562 = vsel %vm513, %v494, 0
    %v565 = vsel %vm513, %v495, 0
    %567 = vmatprep.subr.bf16.mxu0 0
    %568 = vmatpush1.bf16.xpose.msra.mxu0 %v565
    %569 = vmatprep.subr.bf16.mxu0 0
    %570 = vmatpush1.bf16.xpose.msra.mxu0 0
    %571 = vmatprep.subr.bf16.mxu0 0
    %572 = vmatpush1.bf16.xpose.msra.mxu0 0
    %573 = vmatprep.subr.bf16.mxu0 0
    %574 = vmatpush1.bf16.xpose.msra.mxu0 0
    %575 = vmatprep.subr.bf16.mxu0 0
    %576 = vmatpush1.bf16.xpose.msra.mxu0 0
    %577 = vmatprep.subr.bf16.mxu0 0
    %578 = vmatpush1.bf16.xpose.msra.mxu0 0
    %579 = vmatprep.subr.bf16.mxu0 0
    %580 = vmatpush1.bf16.xpose.msra.mxu0 0
    %581 = vmatprep.subr.bf16.mxu0 0
    %582 = vmatpush1.bf16.xpose.msra.mxu0 0
    %583 = vmatprep.subr.bf16.mxu0 0
    %584 = vmatpush1.bf16.xpose.msra.mxu0 0
    %585 = vmatprep.subr.bf16.mxu0 0
    %586 = vmatpush1.bf16.xpose.msra.mxu0 0
    %587 = vmatprep.subr.bf16.mxu0 0
    %588 = vmatpush1.bf16.xpose.msra.mxu0 0
    %589 = vmatprep.subr.bf16.mxu0 0
    %590 = vmatpush1.bf16.xpose.msra.mxu0 0
    %591 = vmatprep.subr.bf16.mxu0 0
    %592 = vmatpush1.bf16.xpose.msra.mxu0 0
    %593 = vmatprep.subr.bf16.mxu0 0
    %594 = vmatpush1.bf16.xpose.msra.mxu0 0
    %595 = vmatprep.subr.bf16.mxu0 0
    %596 = vmatpush1.bf16.xpose.msra.mxu0 0
    %597 = vmatprep.subr.bf16.mxu0 0
    %598 = vmatpush1.bf16.xpose.msra.mxu0 0
    %599 = vmatprep.mubr.bf16.mxu0 0
    %600 = vmatmul.mubr.bf16.gmra.mrb[0].mxu0 %v562
    %v601 = vpop.f32.mrb[0].mxu0
    %v602 = vadd.f32 0.0, %v601
    %v603 = vpop.f32.mrb[0].mxu0
    %v604 = vpop.f32.mrb[0].mxu0
    %v605 = vadd.f32 0.0, %v604
    %v606 = vpop.f32.mrb[0].mxu0
    %607 = vdwg.mxu0
    %vm608 = vcmask 130048
    %v609 = vsel %vm608, %v555, -inf
    %610 = vmax.xlane.f32.xlu0 %v609
    %v611 = vpop.xlane.xlu0 %610
    %v612 = vsel %vm608, %v558, -inf
    %613 = vmax.xlane.f32.xlu0 %v612
    %v614 = vpop.xlane.xlu0 %613
    %v615 = vsel %vm608, %v602, -inf
    %616 = vmax.xlane.f32.xlu0 %v615
    %v617 = vpop.xlane.xlu0 %616
    %v618 = vsel %vm608, %v605, -inf
    %619 = vmax.xlane.f32.xlu0 %v618
    %v620 = vpop.xlane.xlu0 %619
    %v621 = vsub.f32 %v555, %v611
    %v622 = vsub.f32 %v558, %v614
    %v623 = vsub.f32 %v602, %v617
    %v624 = vsub.f32 %v605, %v620
    %v625 = vmul.f32 %v621, 1.442695
    %v626 = vpow.pop %v625
    %v627 = vmul.f32 %v622, 1.442695
    %v628 = vpow.pop %v627
    %v629 = vmul.f32 %v623, 1.442695
    %v630 = vpow.pop %v629
    %v631 = vmul.f32 %v624, 1.442695
    %v632 = vpow.pop %v631
    %v633 = vsel %vm608, %v626, 0.0
    %634 = vadd.xlane.f32.xlu0 %v633
    %v635 = vpop.xlane.xlu0 %634
    %v636 = vsel %vm608, %v628, 0.0
    %637 = vadd.xlane.f32.xlu0 %v636
    %v638 = vpop.xlane.xlu0 %637
    %v639 = vsel %vm608, %v630, 0.0
    %640 = vadd.xlane.f32.xlu0 %v639
    %v641 = vpop.xlane.xlu0 %640
    %v642 = vsel %vm608, %v632, 0.0
    %643 = vadd.xlane.f32.xlu0 %v642
    %v644 = vpop.xlane.xlu0 %643
    %v645 = vrcp.pop %v635
    %v646 = vrcp.pop %v638
    %v647 = vrcp.pop %v641
    %v648 = vrcp.pop %v644
    %v649 = vmul.f32 %v626, %v645
    %v650 = vmul.f32 %v628, %v646
    %v651 = vmul.f32 %v630, %v647
    %v652 = vmul.f32 %v632, %v648
    %v653 = vpack.c.bf16 %v650, %v649
    %v654 = vpack.c.bf16 %v652, %v651
    %v656 = vsel %vm608, %v653, 0
    %658 = vmatprep.subr.bf16.mxu0 0
    %659 = vmatpush1.bf16.msra.mxu0 %v493
    %660 = vmatprep.subr.bf16.mxu0 0
    %661 = vmatpush1.bf16.msra.mxu0 0
    %662 = vmatprep.subr.bf16.mxu0 0
    %663 = vmatpush1.bf16.msra.mxu0 0
    %664 = vmatprep.subr.bf16.mxu0 0
    %665 = vmatpush1.bf16.msra.mxu0 0
    %666 = vmatprep.subr.bf16.mxu0 0
    %667 = vmatpush1.bf16.msra.mxu0 0
    %668 = vmatprep.subr.bf16.mxu0 0
    %669 = vmatpush1.bf16.msra.mxu0 0
    %670 = vmatprep.subr.bf16.mxu0 0
    %671 = vmatpush1.bf16.msra.mxu0 0
    %672 = vmatprep.subr.bf16.mxu0 0
    %673 = vmatpush1.bf16.msra.mxu0 0
    %674 = vmatprep.subr.bf16.mxu0 0
    %675 = vmatpush1.bf16.msra.mxu0 0
    %676 = vmatprep.subr.bf16.mxu0 0
    %677 = vmatpush1.bf16.msra.mxu0 0
    %678 = vmatprep.subr.bf16.mxu0 0
    %679 = vmatpush1.bf16.msra.mxu0 0
    %680 = vmatprep.subr.bf16.mxu0 0
    %681 = vmatpush1.bf16.msra.mxu0 0
    %682 = vmatprep.subr.bf16.mxu0 0
    %683 = vmatpush1.bf16.msra.mxu0 0
    %684 = vmatprep.subr.bf16.mxu0 0
    %685 = vmatpush1.bf16.msra.mxu0 0
    %686 = vmatprep.subr.bf16.mxu0 0
    %687 = vmatpush1.bf16.msra.mxu0 0
    %688 = vmatprep.subr.bf16.mxu0 0
    %689 = vmatpush1.bf16.msra.mxu0 0
    %690 = vmatprep.mubr.bf16.mxu0 0
    %691 = vmatmul.mubr.bf16.gmra.mrb[0].mxu0 %v656
    %v692 = vpop.f32.mrb[0].mxu0
    %v693 = vadd.f32 0.0, %v692
    %v694 = vpop.f32.mrb[0].mxu0
    %v695 = vpop.f32.mrb[0].mxu0
    %v696 = vadd.f32 0.0, %v695
    %v697 = vpop.f32.mrb[0].mxu0
    %698 = vdwg.mxu0
    %v700 = vsel %vm608, %v654, 0
    %702 = vmatprep.subr.bf16.mxu0 0
    %703 = vmatpush1.bf16.msra.mxu0 %v496
    %704 = vmatprep.subr.bf16.mxu0 0
    %705 = vmatpush1.bf16.msra.mxu0 0
    %706 = vmatprep.subr.bf16.mxu0 0
    %707 = vmatpush1.bf16.msra.mxu0 0
    %708 = vmatprep.subr.bf16.mxu0 0
    %709 = vmatpush1.bf16.msra.mxu0 0
    %710 = vmatprep.subr.bf16.mxu0 0
    %711 = vmatpush1.bf16.msra.mxu0 0
    %712 = vmatprep.subr.bf16.mxu0 0
    %713 = vmatpush1.bf16.msra.mxu0 0
    %714 = vmatprep.subr.bf16.mxu0 0
    %715 = vmatpush1.bf16.msra.mxu0 0
    %716 = vmatprep.subr.bf16.mxu0 0
    %717 = vmatpush1.bf16.msra.mxu0 0
    %718 = vmatprep.subr.bf16.mxu0 0
    %719 = vmatpush1.bf16.msra.mxu0 0
    %720 = vmatprep.subr.bf16.mxu0 0
    %721 = vmatpush1.bf16.msra.mxu0 0
    %722 = vmatprep.subr.bf16.mxu0 0
    %723 = vmatpush1.bf16.msra.mxu0 0
    %724 = vmatprep.subr.bf16.mxu0 0
    %725 = vmatpush1.bf16.msra.mxu0 0
    %726 = vmatprep.subr.bf16.mxu0 0
    %727 = vmatpush1.bf16.msra.mxu0 0
    %728 = vmatprep.subr.bf16.mxu0 0
    %729 = vmatpush1.bf16.msra.mxu0 0
    %730 = vmatprep.subr.bf16.mxu0 0
    %731 = vmatpush1.bf16.msra.mxu0 0
    %732 = vmatprep.subr.bf16.mxu0 0
    %733 = vmatpush1.bf16.msra.mxu0 0
    %734 = vmatprep.mubr.bf16.mxu0 0
    %735 = vmatmul.mubr.bf16.gmra.mrb[0].mxu0 %v700
    %v736 = vpop.f32.mrb[0].mxu0
    %v737 = vadd.f32 0.0, %v736
    %v738 = vpop.f32.mrb[0].mxu0
    %v739 = vpop.f32.mrb[0].mxu0
    %v740 = vadd.f32 0.0, %v739
    %v741 = vpop.f32.mrb[0].mxu0
    %742 = vdwg.mxu0
    %v743 = vpack.c.bf16 %v696, %v693
    %v744 = vpack.c.bf16 %v740, %v737
    %746 = vrot.lane.b32.xlu0 %v491, 96
    %v747 = vpop.permute.xlu0 %746
    %749 = vrot.lane.b32.xlu0 %v492, 96
    %v750 = vpop.permute.xlu0 %749
    %v752 = vsel %vm513, %v747, 0
    %v755 = vsel %vm513, %v750, 0
    %757 = vmatprep.subr.bf16.mxu0 0
    %758 = vmatpush1.bf16.xpose.msra.mxu0 %v755
    %759 = vmatprep.subr.bf16.mxu0 0
    %760 = vmatpush1.bf16.xpose.msra.mxu0 0
    %761 = vmatprep.subr.bf16.mxu0 0
    %762 = vmatpush1.bf16.xpose.msra.mxu0 0
    %763 = vmatprep.subr.bf16.mxu0 0
    %764 = vmatpush1.bf16.xpose.msra.mxu0 0
    %765 = vmatprep.subr.bf16.mxu0 0
    %766 = vmatpush1.bf16.xpose.msra.mxu0 0
    %767 = vmatprep.subr.bf16.mxu0 0
    %768 = vmatpush1.bf16.xpose.msra.mxu0 0
    %769 = vmatprep.subr.bf16.mxu0 0
    %770 = vmatpush1.bf16.xpose.msra.mxu0 0
    %771 = vmatprep.subr.bf16.mxu0 0
    %772 = vmatpush1.bf16.xpose.msra.mxu0 0
    %773 = vmatprep.subr.bf16.mxu0 0
    %774 = vmatpush1.bf16.xpose.msra.mxu0 0
    %775 = vmatprep.subr.bf16.mxu0 0
    %776 = vmatpush1.bf16.xpose.msra.mxu0 0
    %777 = vmatprep.subr.bf16.mxu0 0
    %778 = vmatpush1.bf16.xpose.msra.mxu0 0
    %779 = vmatprep.subr.bf16.mxu0 0
    %780 = vmatpush1.bf16.xpose.msra.mxu0 0
    %781 = vmatprep.subr.bf16.mxu0 0
    %782 = vmatpush1.bf16.xpose.msra.mxu0 0
    %783 = vmatprep.subr.bf16.mxu0 0
    %784 = vmatpush1.bf16.xpose.msra.mxu0 0
    %785 = vmatprep.subr.bf16.mxu0 0
    %786 = vmatpush1.bf16.xpose.msra.mxu0 0
    %787 = vmatprep.subr.bf16.mxu0 0
    %788 = vmatpush1.bf16.xpose.msra.mxu0 0
    %789 = vmatprep.mubr.bf16.mxu0 0
    %790 = vmatmul.mubr.bf16.gmra.mrb[0].mxu0 %v752
    %v791 = vpop.f32.mrb[0].mxu0
    %v792 = vadd.f32 0.0, %v791
    %v793 = vpop.f32.mrb[0].mxu0
    %v794 = vpop.f32.mrb[0].mxu0
    %v795 = vadd.f32 0.0, %v794
    %v796 = vpop.f32.mrb[0].mxu0
    %797 = vdwg.mxu0
    %799 = vrot.lane.b32.xlu0 %v494, 96
    %v800 = vpop.permute.xlu0 %799
    %802 = vrot.lane.b32.xlu0 %v495, 96
    %v803 = vpop.permute.xlu0 %802
    %v805 = vsel %vm513, %v800, 0
    %v808 = vsel %vm513, %v803, 0
    %810 = vmatprep.subr.bf16.mxu0 0
    %811 = vmatpush1.bf16.xpose.msra.mxu0 %v808
    %812 = vmatprep.subr.bf16.mxu0 0
    %813 = vmatpush1.bf16.xpose.msra.mxu0 0
    %814 = vmatprep.subr.bf16.mxu0 0
    %815 = vmatpush1.bf16.xpose.msra.mxu0 0
    %816 = vmatprep.subr.bf16.mxu0 0
    %817 = vmatpush1.bf16.xpose.msra.mxu0 0
    %818 = vmatprep.subr.bf16.mxu0 0
    %819 = vmatpush1.bf16.xpose.msra.mxu0 0
    %820 = vmatprep.subr.bf16.mxu0 0
    %821 = vmatpush1.bf16.xpose.msra.mxu0 0
    %822 = vmatprep.subr.bf16.mxu0 0
    %823 = vmatpush1.bf16.xpose.msra.mxu0 0
    %824 = vmatprep.subr.bf16.mxu0 0
    %825 = vmatpush1.bf16.xpose.msra.mxu0 0
    %826 = vmatprep.subr.bf16.mxu0 0
    %827 = vmatpush1.bf16.xpose.msra.mxu0 0
    %828 = vmatprep.subr.bf16.mxu0 0
    %829 = vmatpush1.bf16.xpose.msra.mxu0 0
    %830 = vmatprep.subr.bf16.mxu0 0
    %831 = vmatpush1.bf16.xpose.msra.mxu0 0
    %832 = vmatprep.subr.bf16.mxu0 0
    %833 = vmatpush1.bf16.xpose.msra.mxu0 0
    %834 = vmatprep.subr.bf16.mxu0 0
    %835 = vmatpush1.bf16.xpose.msra.mxu0 0
    %836 = vmatprep.subr.bf16.mxu0 0
    %837 = vmatpush1.bf16.xpose.msra.mxu0 0
    %838 = vmatprep.subr.bf16.mxu0 0
    %839 = vmatpush1.bf16.xpose.msra.mxu0 0
    %840 = vmatprep.subr.bf16.mxu0 0
    %841 = vmatpush1.bf16.xpose.msra.mxu0 0
    %842 = vmatprep.mubr.bf16.mxu0 0
    %843 = vmatmul.mubr.bf16.gmra.mrb[0].mxu0 %v805
    %v844 = vpop.f32.mrb[0].mxu0
    %v845 = vadd.f32 0.0, %v844
    %v846 = vpop.f32.mrb[0].mxu0
    %v847 = vpop.f32.mrb[0].mxu0
    %v848 = vadd.f32 0.0, %v847
    %v849 = vpop.f32.mrb[0].mxu0
    %850 = vdwg.mxu0
    %v851 = vsel %vm608, %v792, -inf
    %852 = vmax.xlane.f32.xlu0 %v851
    %v853 = vpop.xlane.xlu0 %852
    %v854 = vsel %vm608, %v795, -inf
    %855 = vmax.xlane.f32.xlu0 %v854
    %v856 = vpop.xlane.xlu0 %855
    %v857 = vsel %vm608, %v845, -inf
    %858 = vmax.xlane.f32.xlu0 %v857
    %v859 = vpop.xlane.xlu0 %858
    %v860 = vsel %vm608, %v848, -inf
    %861 = vmax.xlane.f32.xlu0 %v860
    %v862 = vpop.xlane.xlu0 %861
    %v863 = vsub.f32 %v792, %v853
    %v864 = vsub.f32 %v795, %v856
    %v865 = vsub.f32 %v845, %v859
    %v866 = vsub.f32 %v848, %v862
    %v867 = vmul.f32 %v863, 1.442695
    %v868 = vpow.pop %v867
    %v869 = vmul.f32 %v864, 1.442695
    %v870 = vpow.pop %v869
    %v871 = vmul.f32 %v865, 1.442695
    %v872 = vpow.pop %v871
    %v873 = vmul.f32 %v866, 1.442695
    %v874 = vpow.pop %v873
    %v875 = vsel %vm608, %v868, 0.0
    %876 = vadd.xlane.f32.xlu0 %v875
    %v877 = vpop.xlane.xlu0 %876
    %v878 = vsel %vm608, %v870, 0.0
    %879 = vadd.xlane.f32.xlu0 %v878
    %v880 = vpop.xlane.xlu0 %879
    %v881 = vsel %vm608, %v872, 0.0
    %882 = vadd.xlane.f32.xlu0 %v881
    %v883 = vpop.xlane.xlu0 %882
    %v884 = vsel %vm608, %v874, 0.0
    %885 = vadd.xlane.f32.xlu0 %v884
    %v886 = vpop.xlane.xlu0 %885
    %v887 = vrcp.pop %v877
    %v888 = vrcp.pop %v880
    %v889 = vrcp.pop %v883
    %v890 = vrcp.pop %v886
    %v891 = vmul.f32 %v868, %v887
    %v892 = vmul.f32 %v870, %v888
    %v893 = vmul.f32 %v872, %v889
    %v894 = vmul.f32 %v874, %v890
    %v895 = vpack.c.bf16 %v892, %v891
    %v896 = vpack.c.bf16 %v894, %v893
    %898 = vrot.lane.b32.xlu0 %v493, 96
    %v899 = vpop.permute.xlu0 %898
    %v902 = vsel %vm608, %v895, 0
    %904 = vmatprep.subr.bf16.mxu0 0
    %905 = vmatpush1.bf16.msra.mxu0 %v899
    %906 = vmatprep.subr.bf16.mxu0 0
    %907 = vmatpush1.bf16.msra.mxu0 0
    %908 = vmatprep.subr.bf16.mxu0 0
    %909 = vmatpush1.bf16.msra.mxu0 0
    %910 = vmatprep.subr.bf16.mxu0 0
    %911 = vmatpush1.bf16.msra.mxu0 0
    %912 = vmatprep.subr.bf16.mxu0 0
    %913 = vmatpush1.bf16.msra.mxu0 0
    %914 = vmatprep.subr.bf16.mxu0 0
    %915 = vmatpush1.bf16.msra.mxu0 0
    %916 = vmatprep.subr.bf16.mxu0 0
    %917 = vmatpush1.bf16.msra.mxu0 0
    %918 = vmatprep.subr.bf16.mxu0 0
    %919 = vmatpush1.bf16.msra.mxu0 0
    %920 = vmatprep.subr.bf16.mxu0 0
    %921 = vmatpush1.bf16.msra.mxu0 0
    %922 = vmatprep.subr.bf16.mxu0 0
    %923 = vmatpush1.bf16.msra.mxu0 0
    %924 = vmatprep.subr.bf16.mxu0 0
    %925 = vmatpush1.bf16.msra.mxu0 0
    %926 = vmatprep.subr.bf16.mxu0 0
    %927 = vmatpush1.bf16.msra.mxu0 0
    %928 = vmatprep.subr.bf16.mxu0 0
    %929 = vmatpush1.bf16.msra.mxu0 0
    %930 = vmatprep.subr.bf16.mxu0 0
    %931 = vmatpush1.bf16.msra.mxu0 0
    %932 = vmatprep.subr.bf16.mxu0 0
    %933 = vmatpush1.bf16.msra.mxu0 0
    %934 = vmatprep.subr.bf16.mxu0 0
    %935 = vmatpush1.bf16.msra.mxu0 0
    %936 = vmatprep.mubr.bf16.mxu0 0
    %937 = vmatmul.mubr.bf16.gmra.mrb[0].mxu0 %v902
    %v938 = vpop.f32.mrb[0].mxu0
    %v939 = vadd.f32 0.0, %v938
    %v940 = vpop.f32.mrb[0].mxu0
    %v941 = vpop.f32.mrb[0].mxu0
    %v942 = vadd.f32 0.0, %v941
    %v943 = vpop.f32.mrb[0].mxu0
    %944 = vdwg.mxu0
    %946 = vrot.lane.b32.xlu0 %v496, 96
    %v947 = vpop.permute.xlu0 %946
    %v950 = vsel %vm608, %v896, 0
    %952 = vmatprep.subr.bf16.mxu0 0
    %953 = vmatpush1.bf16.msra.mxu0 %v947
    %954 = vmatprep.subr.bf16.mxu0 0
    %955 = vmatpush1.bf16.msra.mxu0 0
    %956 = vmatprep.subr.bf16.mxu0 0
    %957 = vmatpush1.bf16.msra.mxu0 0
    %958 = vmatprep.subr.bf16.mxu0 0
    %959 = vmatpush1.bf16.msra.mxu0 0
    %960 = vmatprep.subr.bf16.mxu0 0
    %961 = vmatpush1.bf16.msra.mxu0 0
    %962 = vmatprep.subr.bf16.mxu0 0
    %963 = vmatpush1.bf16.msra.mxu0 0
    %964 = vmatprep.subr.bf16.mxu0 0
    %965 = vmatpush1.bf16.msra.mxu0 0
    %966 = vmatprep.subr.bf16.mxu0 0
    %967 = vmatpush1.bf16.msra.mxu0 0
    %968 = vmatprep.subr.bf16.mxu0 0
    %969 = vmatpush1.bf16.msra.mxu0 0
    %970 = vmatprep.subr.bf16.mxu0 0
    %971 = vmatpush1.bf16.msra.mxu0 0
    %972 = vmatprep.subr.bf16.mxu0 0
    %973 = vmatpush1.bf16.msra.mxu0 0
    %974 = vmatprep.subr.bf16.mxu0 0
    %975 = vmatpush1.bf16.msra.mxu0 0
    %976 = vmatprep.subr.bf16.mxu0 0
    %977 = vmatpush1.bf16.msra.mxu0 0
    %978 = vmatprep.subr.bf16.mxu0 0
    %979 = vmatpush1.bf16.msra.mxu0 0
    %980 = vmatprep.subr.bf16.mxu0 0
    %981 = vmatpush1.bf16.msra.mxu0 0
    %982 = vmatprep.subr.bf16.mxu0 0
    %983 = vmatpush1.bf16.msra.mxu0 0
    %984 = vmatprep.mubr.bf16.mxu0 0
    %985 = vmatmul.mubr.bf16.gmra.mrb[0].mxu0 %v950
    %v986 = vpop.f32.mrb[0].mxu0
    %v987 = vadd.f32 0.0, %v986
    %v988 = vpop.f32.mrb[0].mxu0
    %v989 = vpop.f32.mrb[0].mxu0
    %v990 = vadd.f32 0.0, %v989
    %v991 = vpop.f32.mrb[0].mxu0
    %992 = vdwg.mxu0
    %v993 = vpack.c.bf16 %v942, %v939
    %v994 = vpack.c.bf16 %v990, %v987
    %v999 = vunpack.c.l.b16 %v501
    %v1000 = vunpack.c.l.b16 %v502
    %v1001 = vunpack.c.l.b16 %v503
    %v1002 = vunpack.c.l.b16 %v504
    %v1003 = vpack.c.b16 %v1000, %v999
    %v1004 = vpack.c.b16 %v1002, %v1001
    %v1008 = vsel %vm513, %v993, 0
    %v1011 = vsel %vm513, %v994, 0
    %1013 = vmatprep.subr.bf16.mxu0 0
    %1014 = vmatpush1.bf16.msra.mxu0 %v1003
    %1015 = vmatprep.subr.bf16.mxu0 0
    %1016 = vmatpush1.bf16.msra.mxu0 %v1004
    %1017 = vmatprep.subr.bf16.mxu0 0
    %1018 = vmatpush1.bf16.msra.mxu0 0
    %1019 = vmatprep.subr.bf16.mxu0 0
    %1020 = vmatpush1.bf16.msra.mxu0 0
    %1021 = vmatprep.subr.bf16.mxu0 0
    %1022 = vmatpush1.bf16.msra.mxu0 0
    %1023 = vmatprep.subr.bf16.mxu0 0
    %1024 = vmatpush1.bf16.msra.mxu0 0
    %1025 = vmatprep.subr.bf16.mxu0 0
    %1026 = vmatpush1.bf16.msra.mxu0 0
    %1027 = vmatprep.subr.bf16.mxu0 0
    %1028 = vmatpush1.bf16.msra.mxu0 0
    %1029 = vmatprep.subr.bf16.mxu0 0
    %1030 = vmatpush1.bf16.msra.mxu0 0
    %1031 = vmatprep.subr.bf16.mxu0 0
    %1032 = vmatpush1.bf16.msra.mxu0 0
    %1033 = vmatprep.subr.bf16.mxu0 0
    %1034 = vmatpush1.bf16.msra.mxu0 0
    %1035 = vmatprep.subr.bf16.mxu0 0
    %1036 = vmatpush1.bf16.msra.mxu0 0
    %1037 = vmatprep.subr.bf16.mxu0 0
    %1038 = vmatpush1.bf16.msra.mxu0 0
    %1039 = vmatprep.subr.bf16.mxu0 0
    %1040 = vmatpush1.bf16.msra.mxu0 0
    %1041 = vmatprep.subr.bf16.mxu0 0
    %1042 = vmatpush1.bf16.msra.mxu0 0
    %1043 = vmatprep.subr.bf16.mxu0 0
    %1044 = vmatpush1.bf16.msra.mxu0 0
    %1045 = vmatprep.mubr.bf16.mxu0 0
    %1046 = vmatmul.mubr.bf16.gmra.mrb[0].mxu0 %v1008
    %v1047 = vpop.f32.mrb[0].mxu0
    %v1048 = vadd.f32 0.0, %v1047
    %v1049 = vpop.f32.mrb[0].mxu0
    %v1050 = vpop.f32.mrb[0].mxu0
    %v1051 = vadd.f32 0.0, %v1050
    %v1052 = vpop.f32.mrb[0].mxu0
    %1053 = vmatprep.mubr.bf16.mxu0 0
    %1054 = vmatmul.mubr.bf16.gmra.mrb[0].mxu0 %v1011
    %v1055 = vpop.f32.mrb[0].mxu0
    %v1056 = vadd.f32 0.0, %v1055
    %v1057 = vpop.f32.mrb[0].mxu0
    %v1058 = vpop.f32.mrb[0].mxu0
    %v1059 = vadd.f32 0.0, %v1058
    %v1060 = vpop.f32.mrb[0].mxu0
    %1061 = vdwg.mxu0
    %v1066 = vunpack.c.l.b16 %v497
    %v1067 = vunpack.c.l.b16 %v498
    %v1068 = vunpack.c.l.b16 %v499
    %v1069 = vunpack.c.l.b16 %v500
    %v1070 = vpack.c.b16 %v1067, %v1066
    %v1071 = vpack.c.b16 %v1069, %v1068
    %v1075 = vsel %vm513, %v743, 0
    %v1078 = vsel %vm513, %v744, 0
    %1080 = vmatprep.subr.bf16.mxu0 0
    %1081 = vmatpush1.bf16.msra.mxu0 %v1070
    %1082 = vmatprep.subr.bf16.mxu0 0
    %1083 = vmatpush1.bf16.msra.mxu0 %v1071
    %1084 = vmatprep.subr.bf16.mxu0 0
    %1085 = vmatpush1.bf16.msra.mxu0 0
    %1086 = vmatprep.subr.bf16.mxu0 0
    %1087 = vmatpush1.bf16.msra.mxu0 0
    %1088 = vmatprep.subr.bf16.mxu0 0
    %1089 = vmatpush1.bf16.msra.mxu0 0
    %1090 = vmatprep.subr.bf16.mxu0 0
    %1091 = vmatpush1.bf16.msra.mxu0 0
    %1092 = vmatprep.subr.bf16.mxu0 0
    %1093 = vmatpush1.bf16.msra.mxu0 0
    %1094 = vmatprep.subr.bf16.mxu0 0
    %1095 = vmatpush1.bf16.msra.mxu0 0
    %1096 = vmatprep.subr.bf16.mxu0 0
    %1097 = vmatpush1.bf16.msra.mxu0 0
    %1098 = vmatprep.subr.bf16.mxu0 0
    %1099 = vmatpush1.bf16.msra.mxu0 0
    %1100 = vmatprep.subr.bf16.mxu0 0
    %1101 = vmatpush1.bf16.msra.mxu0 0
    %1102 = vmatprep.subr.bf16.mxu0 0
    %1103 = vmatpush1.bf16.msra.mxu0 0
    %1104 = vmatprep.subr.bf16.mxu0 0
    %1105 = vmatpush1.bf16.msra.mxu0 0
    %1106 = vmatprep.subr.bf16.mxu0 0
    %1107 = vmatpush1.bf16.msra.mxu0 0
    %1108 = vmatprep.subr.bf16.mxu0 0
    %1109 = vmatpush1.bf16.msra.mxu0 0
    %1110 = vmatprep.subr.bf16.mxu0 0
    %1111 = vmatpush1.bf16.msra.mxu0 0
    %1112 = vmatprep.mubr.bf16.mxu0 0
    %1113 = vmatmul.mubr.bf16.gmra.mrb[0].mxu0 %v1075
    %v1114 = vpop.f32.mrb[0].mxu0
    %v1115 = vadd.f32 %v1048, %v1114
    %v1116 = vpop.f32.mrb[0].mxu0
    %v1117 = vpop.f32.mrb[0].mxu0
    %v1118 = vadd.f32 %v1051, %v1117
    %v1119 = vpop.f32.mrb[0].mxu0
    %1120 = vmatprep.mubr.bf16.mxu0 0
    %1121 = vmatmul.mubr.bf16.gmra.mrb[0].mxu0 %v1078
    %v1122 = vpop.f32.mrb[0].mxu0
    %v1123 = vadd.f32 %v1056, %v1122
    %v1124 = vpop.f32.mrb[0].mxu0
    %v1125 = vpop.f32.mrb[0].mxu0
    %v1126 = vadd.f32 %v1059, %v1125
    %v1127 = vpop.f32.mrb[0].mxu0
    %1128 = vdwg.mxu0
    %1129 = vrot.lane.b32.xlu0 %v491, 64
    %v1130 = vpop.permute.xlu0 %1129
    %1131 = vrot.lane.b32.xlu0 %v492, 64
    %v1132 = vpop.permute.xlu0 %1131
    %v1134 = vsel %vm513, %v1130, 0
    %v1137 = vsel %vm513, %v1132, 0
    %1139 = vmatprep.subr.bf16.mxu0 0
    %1140 = vmatpush1.bf16.xpose.msra.mxu0 %v1137
    %1141 = vmatprep.subr.bf16.mxu0 0
    %1142 = vmatpush1.bf16.xpose.msra.mxu0 0
    %1143 = vmatprep.subr.bf16.mxu0 0
    %1144 = vmatpush1.bf16.xpose.msra.mxu0 0
    %1145 = vmatprep.subr.bf16.mxu0 0
    %1146 = vmatpush1.bf16.xpose.msra.mxu0 0
    %1147 = vmatprep.subr.bf16.mxu0 0
    %1148 = vmatpush1.bf16.xpose.msra.mxu0 0
    %1149 = vmatprep.subr.bf16.mxu0 0
    %1150 = vmatpush1.bf16.xpose.msra.mxu0 0
    %1151 = vmatprep.subr.bf16.mxu0 0
    %1152 = vmatpush1.bf16.xpose.msra.mxu0 0
    %1153 = vmatprep.subr.bf16.mxu0 0
    %1154 = vmatpush1.bf16.xpose.msra.mxu0 0
    %1155 = vmatprep.subr.bf16.mxu0 0
    %1156 = vmatpush1.bf16.xpose.msra.mxu0 0
    %1157 = vmatprep.subr.bf16.mxu0 0
    %1158 = vmatpush1.bf16.xpose.msra.mxu0 0
    %1159 = vmatprep.subr.bf16.mxu0 0
    %1160 = vmatpush1.bf16.xpose.msra.mxu0 0
    %1161 = vmatprep.subr.bf16.mxu0 0
    %1162 = vmatpush1.bf16.xpose.msra.mxu0 0
    %1163 = vmatprep.subr.bf16.mxu0 0
    %1164 = vmatpush1.bf16.xpose.msra.mxu0 0
    %1165 = vmatprep.subr.bf16.mxu0 0
    %1166 = vmatpush1.bf16.xpose.msra.mxu0 0
    %1167 = vmatprep.subr.bf16.mxu0 0
    %1168 = vmatpush1.bf16.xpose.msra.mxu0 0
    %1169 = vmatprep.subr.bf16.mxu0 0
    %1170 = vmatpush1.bf16.xpose.msra.mxu0 0
    %1171 = vmatprep.mubr.bf16.mxu0 0
    %1172 = vmatmul.mubr.bf16.gmra.mrb[0].mxu0 %v1134
    %v1173 = vpop.f32.mrb[0].mxu0
    %v1174 = vadd.f32 0.0, %v1173
    %v1175 = vpop.f32.mrb[0].mxu0
    %v1176 = vpop.f32.mrb[0].mxu0
    %v1177 = vadd.f32 0.0, %v1176
    %v1178 = vpop.f32.mrb[0].mxu0
    %1179 = vdwg.mxu0
    %1180 = vrot.lane.b32.xlu0 %v494, 64
    %v1181 = vpop.permute.xlu0 %1180
    %1182 = vrot.lane.b32.xlu0 %v495, 64
    %v1183 = vpop.permute.xlu0 %1182
    %v1185 = vsel %vm513, %v1181, 0
    %v1188 = vsel %vm513, %v1183, 0
    %1190 = vmatprep.subr.bf16.mxu0 0
    %1191 = vmatpush1.bf16.xpose.msra.mxu0 %v1188
    %1192 = vmatprep.subr.bf16.mxu0 0
    %1193 = vmatpush1.bf16.xpose.msra.mxu0 0
    %1194 = vmatprep.subr.bf16.mxu0 0
    %1195 = vmatpush1.bf16.xpose.msra.mxu0 0
    %1196 = vmatprep.subr.bf16.mxu0 0
    %1197 = vmatpush1.bf16.xpose.msra.mxu0 0
    %1198 = vmatprep.subr.bf16.mxu0 0
    %1199 = vmatpush1.bf16.xpose.msra.mxu0 0
    %1200 = vmatprep.subr.bf16.mxu0 0
    %1201 = vmatpush1.bf16.xpose.msra.mxu0 0
    %1202 = vmatprep.subr.bf16.mxu0 0
    %1203 = vmatpush1.bf16.xpose.msra.mxu0 0
    %1204 = vmatprep.subr.bf16.mxu0 0
    %1205 = vmatpush1.bf16.xpose.msra.mxu0 0
    %1206 = vmatprep.subr.bf16.mxu0 0
    %1207 = vmatpush1.bf16.xpose.msra.mxu0 0
    %1208 = vmatprep.subr.bf16.mxu0 0
    %1209 = vmatpush1.bf16.xpose.msra.mxu0 0
    %1210 = vmatprep.subr.bf16.mxu0 0
    %1211 = vmatpush1.bf16.xpose.msra.mxu0 0
    %1212 = vmatprep.subr.bf16.mxu0 0
    %1213 = vmatpush1.bf16.xpose.msra.mxu0 0
    %1214 = vmatprep.subr.bf16.mxu0 0
    %1215 = vmatpush1.bf16.xpose.msra.mxu0 0
    %1216 = vmatprep.subr.bf16.mxu0 0
    %1217 = vmatpush1.bf16.xpose.msra.mxu0 0
    %1218 = vmatprep.subr.bf16.mxu0 0
    %1219 = vmatpush1.bf16.xpose.msra.mxu0 0
    %1220 = vmatprep.subr.bf16.mxu0 0
    %1221 = vmatpush1.bf16.xpose.msra.mxu0 0
    %1222 = vmatprep.mubr.bf16.mxu0 0
    %1223 = vmatmul.mubr.bf16.gmra.mrb[0].mxu0 %v1185
    %v1224 = vpop.f32.mrb[0].mxu0
    %v1225 = vadd.f32 0.0, %v1224
    %v1226 = vpop.f32.mrb[0].mxu0
    %v1227 = vpop.f32.mrb[0].mxu0
    %v1228 = vadd.f32 0.0, %v1227
    %v1229 = vpop.f32.mrb[0].mxu0
    %1230 = vdwg.mxu0
    %v1231 = vsel %vm608, %v1174, -inf
    %1232 = vmax.xlane.f32.xlu0 %v1231
    %v1233 = vpop.xlane.xlu0 %1232
    %v1234 = vsel %vm608, %v1177, -inf
    %1235 = vmax.xlane.f32.xlu0 %v1234
    %v1236 = vpop.xlane.xlu0 %1235
    %v1237 = vsel %vm608, %v1225, -inf
    %1238 = vmax.xlane.f32.xlu0 %v1237
    %v1239 = vpop.xlane.xlu0 %1238
    %v1240 = vsel %vm608, %v1228, -inf
    %1241 = vmax.xlane.f32.xlu0 %v1240
    %v1242 = vpop.xlane.xlu0 %1241
    %v1243 = vsub.f32 %v1174, %v1233
    %v1244 = vsub.f32 %v1177, %v1236
    %v1245 = vsub.f32 %v1225, %v1239
    %v1246 = vsub.f32 %v1228, %v1242
    %v1247 = vmul.f32 %v1243, 1.442695
    %v1248 = vpow.pop %v1247
    %v1249 = vmul.f32 %v1244, 1.442695
    %v1250 = vpow.pop %v1249
    %v1251 = vmul.f32 %v1245, 1.442695
    %v1252 = vpow.pop %v1251
    %v1253 = vmul.f32 %v1246, 1.442695
    %v1254 = vpow.pop %v1253
    %v1255 = vsel %vm608, %v1248, 0.0
    %1256 = vadd.xlane.f32.xlu0 %v1255
    %v1257 = vpop.xlane.xlu0 %1256
    %v1258 = vsel %vm608, %v1250, 0.0
    %1259 = vadd.xlane.f32.xlu0 %v1258
    %v1260 = vpop.xlane.xlu0 %1259
    %v1261 = vsel %vm608, %v1252, 0.0
    %1262 = vadd.xlane.f32.xlu0 %v1261
    %v1263 = vpop.xlane.xlu0 %1262
    %v1264 = vsel %vm608, %v1254, 0.0
    %1265 = vadd.xlane.f32.xlu0 %v1264
    %v1266 = vpop.xlane.xlu0 %1265
    %v1267 = vrcp.pop %v1257
    %v1268 = vrcp.pop %v1260
    %v1269 = vrcp.pop %v1263
    %v1270 = vrcp.pop %v1266
    %v1271 = vmul.f32 %v1248, %v1267
    %v1272 = vmul.f32 %v1250, %v1268
    %v1273 = vmul.f32 %v1252, %v1269
    %v1274 = vmul.f32 %v1254, %v1270
    %v1275 = vpack.c.bf16 %v1272, %v1271
    %v1276 = vpack.c.bf16 %v1274, %v1273
    %1277 = vrot.lane.b32.xlu0 %v493, 64
    %v1278 = vpop.permute.xlu0 %1277
    %v1281 = vsel %vm608, %v1275, 0
    %1283 = vmatprep.subr.bf16.mxu0 0
    %1284 = vmatpush1.bf16.msra.mxu0 %v1278
    %1285 = vmatprep.subr.bf16.mxu0 0
    %1286 = vmatpush1.bf16.msra.mxu0 0
    %1287 = vmatprep.subr.bf16.mxu0 0
    %1288 = vmatpush1.bf16.msra.mxu0 0
    %1289 = vmatprep.subr.bf16.mxu0 0
    %1290 = vmatpush1.bf16.msra.mxu0 0
    %1291 = vmatprep.subr.bf16.mxu0 0
    %1292 = vmatpush1.bf16.msra.mxu0 0
    %1293 = vmatprep.subr.bf16.mxu0 0
    %1294 = vmatpush1.bf16.msra.mxu0 0
    %1295 = vmatprep.subr.bf16.mxu0 0
    %1296 = vmatpush1.bf16.msra.mxu0 0
    %1297 = vmatprep.subr.bf16.mxu0 0
    %1298 = vmatpush1.bf16.msra.mxu0 0
    %1299 = vmatprep.subr.bf16.mxu0 0
    %1300 = vmatpush1.bf16.msra.mxu0 0
    %1301 = vmatprep.subr.bf16.mxu0 0
    %1302 = vmatpush1.bf16.msra.mxu0 0
    %1303 = vmatprep.subr.bf16.mxu0 0
    %1304 = vmatpush1.bf16.msra.mxu0 0
    %1305 = vmatprep.subr.bf16.mxu0 0
    %1306 = vmatpush1.bf16.msra.mxu0 0
    %1307 = vmatprep.subr.bf16.mxu0 0
    %1308 = vmatpush1.bf16.msra.mxu0 0
    %1309 = vmatprep.subr.bf16.mxu0 0
    %1310 = vmatpush1.bf16.msra.mxu0 0
    %1311 = vmatprep.subr.bf16.mxu0 0
    %1312 = vmatpush1.bf16.msra.mxu0 0
    %1313 = vmatprep.subr.bf16.mxu0 0
    %1314 = vmatpush1.bf16.msra.mxu0 0
    %1315 = vmatprep.mubr.bf16.mxu0 0
    %1316 = vmatmul.mubr.bf16.gmra.mrb[0].mxu0 %v1281
    %v1317 = vpop.f32.mrb[0].mxu0
    %v1318 = vadd.f32 0.0, %v1317
    %v1319 = vpop.f32.mrb[0].mxu0
    %v1320 = vpop.f32.mrb[0].mxu0
    %v1321 = vadd.f32 0.0, %v1320
    %v1322 = vpop.f32.mrb[0].mxu0
    %1323 = vdwg.mxu0
    %1324 = vrot.lane.b32.xlu0 %v496, 64
    %v1325 = vpop.permute.xlu0 %1324
    %v1328 = vsel %vm608, %v1276, 0
    %1330 = vmatprep.subr.bf16.mxu0 0
    %1331 = vmatpush1.bf16.msra.mxu0 %v1325
    %1332 = vmatprep.subr.bf16.mxu0 0
    %1333 = vmatpush1.bf16.msra.mxu0 0
    %1334 = vmatprep.subr.bf16.mxu0 0
    %1335 = vmatpush1.bf16.msra.mxu0 0
    %1336 = vmatprep.subr.bf16.mxu0 0
    %1337 = vmatpush1.bf16.msra.mxu0 0
    %1338 = vmatprep.subr.bf16.mxu0 0
    %1339 = vmatpush1.bf16.msra.mxu0 0
    %1340 = vmatprep.subr.bf16.mxu0 0
    %1341 = vmatpush1.bf16.msra.mxu0 0
    %1342 = vmatprep.subr.bf16.mxu0 0
    %1343 = vmatpush1.bf16.msra.mxu0 0
    %1344 = vmatprep.subr.bf16.mxu0 0
    %1345 = vmatpush1.bf16.msra.mxu0 0
    %1346 = vmatprep.subr.bf16.mxu0 0
    %1347 = vmatpush1.bf16.msra.mxu0 0
    %1348 = vmatprep.subr.bf16.mxu0 0
    %1349 = vmatpush1.bf16.msra.mxu0 0
    %1350 = vmatprep.subr.bf16.mxu0 0
    %1351 = vmatpush1.bf16.msra.mxu0 0
    %1352 = vmatprep.subr.bf16.mxu0 0
    %1353 = vmatpush1.bf16.msra.mxu0 0
    %1354 = vmatprep.subr.bf16.mxu0 0
    %1355 = vmatpush1.bf16.msra.mxu0 0
    %1356 = vmatprep.subr.bf16.mxu0 0
    %1357 = vmatpush1.bf16.msra.mxu0 0
    %1358 = vmatprep.subr.bf16.mxu0 0
    %1359 = vmatpush1.bf16.msra.mxu0 0
    %1360 = vmatprep.subr.bf16.mxu0 0
    %1361 = vmatpush1.bf16.msra.mxu0 0
    %1362 = vmatprep.mubr.bf16.mxu0 0
    %1363 = vmatmul.mubr.bf16.gmra.mrb[0].mxu0 %v1328
    %v1364 = vpop.f32.mrb[0].mxu0
    %v1365 = vadd.f32 0.0, %v1364
    %v1366 = vpop.f32.mrb[0].mxu0
    %v1367 = vpop.f32.mrb[0].mxu0
    %v1368 = vadd.f32 0.0, %v1367
    %v1369 = vpop.f32.mrb[0].mxu0
    %1370 = vdwg.mxu0
    %v1371 = vpack.c.bf16 %v1321, %v1318
    %v1372 = vpack.c.bf16 %v1368, %v1365
    %v1377 = vunpack.c.l.b16 %v505
    %v1378 = vunpack.c.l.b16 %v506
    %v1379 = vunpack.c.l.b16 %v507
    %v1380 = vunpack.c.l.b16 %v508
    %v1381 = vpack.c.b16 %v1378, %v1377
    %v1382 = vpack.c.b16 %v1380, %v1379
    %v1386 = vsel %vm513, %v1371, 0
    %v1389 = vsel %vm513, %v1372, 0
    %1391 = vmatprep.subr.bf16.mxu0 0
    %1392 = vmatpush1.bf16.msra.mxu0 %v1381
    %1393 = vmatprep.subr.bf16.mxu0 0
    %1394 = vmatpush1.bf16.msra.mxu0 %v1382
    %1395 = vmatprep.subr.bf16.mxu0 0
    %1396 = vmatpush1.bf16.msra.mxu0 0
    %1397 = vmatprep.subr.bf16.mxu0 0
    %1398 = vmatpush1.bf16.msra.mxu0 0
    %1399 = vmatprep.subr.bf16.mxu0 0
    %1400 = vmatpush1.bf16.msra.mxu0 0
    %1401 = vmatprep.subr.bf16.mxu0 0
    %1402 = vmatpush1.bf16.msra.mxu0 0
    %1403 = vmatprep.subr.bf16.mxu0 0
    %1404 = vmatpush1.bf16.msra.mxu0 0
    %1405 = vmatprep.subr.bf16.mxu0 0
    %1406 = vmatpush1.bf16.msra.mxu0 0
    %1407 = vmatprep.subr.bf16.mxu0 0
    %1408 = vmatpush1.bf16.msra.mxu0 0
    %1409 = vmatprep.subr.bf16.mxu0 0
    %1410 = vmatpush1.bf16.msra.mxu0 0
    %1411 = vmatprep.subr.bf16.mxu0 0
    %1412 = vmatpush1.bf16.msra.mxu0 0
    %1413 = vmatprep.subr.bf16.mxu0 0
    %1414 = vmatpush1.bf16.msra.mxu0 0
    %1415 = vmatprep.subr.bf16.mxu0 0
    %1416 = vmatpush1.bf16.msra.mxu0 0
    %1417 = vmatprep.subr.bf16.mxu0 0
    %1418 = vmatpush1.bf16.msra.mxu0 0
    %1419 = vmatprep.subr.bf16.mxu0 0
    %1420 = vmatpush1.bf16.msra.mxu0 0
    %1421 = vmatprep.subr.bf16.mxu0 0
    %1422 = vmatpush1.bf16.msra.mxu0 0
    %1423 = vmatprep.mubr.bf16.mxu0 0
    %1424 = vmatmul.mubr.bf16.gmra.mrb[0].mxu0 %v1386
    %v1425 = vpop.f32.mrb[0].mxu0
    %v1426 = vadd.f32 0.0, %v1425
    %v1427 = vpop.f32.mrb[0].mxu0
    %v1428 = vpop.f32.mrb[0].mxu0
    %v1429 = vadd.f32 0.0, %v1428
    %v1430 = vpop.f32.mrb[0].mxu0
    %1431 = vmatprep.mubr.bf16.mxu0 0
    %1432 = vmatmul.mubr.bf16.gmra.mrb[0].mxu0 %v1389
    %v1433 = vpop.f32.mrb[0].mxu0
    %v1434 = vadd.f32 0.0, %v1433
    %v1435 = vpop.f32.mrb[0].mxu0
    %v1436 = vpop.f32.mrb[0].mxu0
    %v1437 = vadd.f32 0.0, %v1436
    %v1438 = vpop.f32.mrb[0].mxu0
    %1439 = vdwg.mxu0
    %v1440 = vadd.f32 %v1115, %v1426
    %v1441 = vadd.f32 %v1118, %v1429
    %v1442 = vadd.f32 %v1123, %v1434
    %v1443 = vadd.f32 %v1126, %v1437
    %1444 = vrot.lane.b32.xlu0 %v491, 32
    %v1445 = vpop.permute.xlu0 %1444
    %1446 = vrot.lane.b32.xlu0 %v492, 32
    %v1447 = vpop.permute.xlu0 %1446
    %v1449 = vsel %vm513, %v1445, 0
    %v1452 = vsel %vm513, %v1447, 0
    %1454 = vmatprep.subr.bf16.mxu0 0
    %1455 = vmatpush1.bf16.xpose.msra.mxu0 %v1452
    %1456 = vmatprep.subr.bf16.mxu0 0
    %1457 = vmatpush1.bf16.xpose.msra.mxu0 0
    %1458 = vmatprep.subr.bf16.mxu0 0
    %1459 = vmatpush1.bf16.xpose.msra.mxu0 0
    %1460 = vmatprep.subr.bf16.mxu0 0
    %1461 = vmatpush1.bf16.xpose.msra.mxu0 0
    %1462 = vmatprep.subr.bf16.mxu0 0
    %1463 = vmatpush1.bf16.xpose.msra.mxu0 0
    %1464 = vmatprep.subr.bf16.mxu0 0
    %1465 = vmatpush1.bf16.xpose.msra.mxu0 0
    %1466 = vmatprep.subr.bf16.mxu0 0
    %1467 = vmatpush1.bf16.xpose.msra.mxu0 0
    %1468 = vmatprep.subr.bf16.mxu0 0
    %1469 = vmatpush1.bf16.xpose.msra.mxu0 0
    %1470 = vmatprep.subr.bf16.mxu0 0
    %1471 = vmatpush1.bf16.xpose.msra.mxu0 0
    %1472 = vmatprep.subr.bf16.mxu0 0
    %1473 = vmatpush1.bf16.xpose.msra.mxu0 0
    %1474 = vmatprep.subr.bf16.mxu0 0
    %1475 = vmatpush1.bf16.xpose.msra.mxu0 0
    %1476 = vmatprep.subr.bf16.mxu0 0
    %1477 = vmatpush1.bf16.xpose.msra.mxu0 0
    %1478 = vmatprep.subr.bf16.mxu0 0
    %1479 = vmatpush1.bf16.xpose.msra.mxu0 0
    %1480 = vmatprep.subr.bf16.mxu0 0
    %1481 = vmatpush1.bf16.xpose.msra.mxu0 0
    %1482 = vmatprep.subr.bf16.mxu0 0
    %1483 = vmatpush1.bf16.xpose.msra.mxu0 0
    %1484 = vmatprep.subr.bf16.mxu0 0
    %1485 = vmatpush1.bf16.xpose.msra.mxu0 0
    %1486 = vmatprep.mubr.bf16.mxu0 0
    %1487 = vmatmul.mubr.bf16.gmra.mrb[0].mxu0 %v1449
    %v1488 = vpop.f32.mrb[0].mxu0
    %v1489 = vadd.f32 0.0, %v1488
    %v1490 = vpop.f32.mrb[0].mxu0
    %v1491 = vpop.f32.mrb[0].mxu0
    %v1492 = vadd.f32 0.0, %v1491
    %v1493 = vpop.f32.mrb[0].mxu0
    %1494 = vdwg.mxu0
    %1495 = vrot.lane.b32.xlu0 %v494, 32
    %v1496 = vpop.permute.xlu0 %1495
    %1497 = vrot.lane.b32.xlu0 %v495, 32
    %v1498 = vpop.permute.xlu0 %1497
    %v1500 = vsel %vm513, %v1496, 0
    %v1503 = vsel %vm513, %v1498, 0
    %1505 = vmatprep.subr.bf16.mxu0 0
    %1506 = vmatpush1.bf16.xpose.msra.mxu0 %v1503
    %1507 = vmatprep.subr.bf16.mxu0 0
    %1508 = vmatpush1.bf16.xpose.msra.mxu0 0
    %1509 = vmatprep.subr.bf16.mxu0 0
    %1510 = vmatpush1.bf16.xpose.msra.mxu0 0
    %1511 = vmatprep.subr.bf16.mxu0 0
    %1512 = vmatpush1.bf16.xpose.msra.mxu0 0
    %1513 = vmatprep.subr.bf16.mxu0 0
    %1514 = vmatpush1.bf16.xpose.msra.mxu0 0
    %1515 = vmatprep.subr.bf16.mxu0 0
    %1516 = vmatpush1.bf16.xpose.msra.mxu0 0
    %1517 = vmatprep.subr.bf16.mxu0 0
    %1518 = vmatpush1.bf16.xpose.msra.mxu0 0
    %1519 = vmatprep.subr.bf16.mxu0 0
    %1520 = vmatpush1.bf16.xpose.msra.mxu0 0
    %1521 = vmatprep.subr.bf16.mxu0 0
    %1522 = vmatpush1.bf16.xpose.msra.mxu0 0
    %1523 = vmatprep.subr.bf16.mxu0 0
    %1524 = vmatpush1.bf16.xpose.msra.mxu0 0
    %1525 = vmatprep.subr.bf16.mxu0 0
    %1526 = vmatpush1.bf16.xpose.msra.mxu0 0
    %1527 = vmatprep.subr.bf16.mxu0 0
    %1528 = vmatpush1.bf16.xpose.msra.mxu0 0
    %1529 = vmatprep.subr.bf16.mxu0 0
    %1530 = vmatpush1.bf16.xpose.msra.mxu0 0
    %1531 = vmatprep.subr.bf16.mxu0 0
    %1532 = vmatpush1.bf16.xpose.msra.mxu0 0
    %1533 = vmatprep.subr.bf16.mxu0 0
    %1534 = vmatpush1.bf16.xpose.msra.mxu0 0
    %1535 = vmatprep.subr.bf16.mxu0 0
    %1536 = vmatpush1.bf16.xpose.msra.mxu0 0
    %1537 = vmatprep.mubr.bf16.mxu0 0
    %1538 = vmatmul.mubr.bf16.gmra.mrb[0].mxu0 %v1500
    %v1539 = vpop.f32.mrb[0].mxu0
    %v1540 = vadd.f32 0.0, %v1539
    %v1541 = vpop.f32.mrb[0].mxu0
    %v1542 = vpop.f32.mrb[0].mxu0
    %v1543 = vadd.f32 0.0, %v1542
    %v1544 = vpop.f32.mrb[0].mxu0
    %1545 = vdwg.mxu0
    %v1546 = vsel %vm608, %v1489, -inf
    %1547 = vmax.xlane.f32.xlu0 %v1546
    %v1548 = vpop.xlane.xlu0 %1547
    %v1549 = vsel %vm608, %v1492, -inf
    %1550 = vmax.xlane.f32.xlu0 %v1549
    %v1551 = vpop.xlane.xlu0 %1550
    %v1552 = vsel %vm608, %v1540, -inf
    %1553 = vmax.xlane.f32.xlu0 %v1552
    %v1554 = vpop.xlane.xlu0 %1553
    %v1555 = vsel %vm608, %v1543, -inf
    %1556 = vmax.xlane.f32.xlu0 %v1555
    %v1557 = vpop.xlane.xlu0 %1556
    %v1558 = vsub.f32 %v1489, %v1548
    %v1559 = vsub.f32 %v1492, %v1551
    %v1560 = vsub.f32 %v1540, %v1554
    %v1561 = vsub.f32 %v1543, %v1557
    %v1562 = vmul.f32 %v1558, 1.442695
    %v1563 = vpow.pop %v1562
    %v1564 = vmul.f32 %v1559, 1.442695
    %v1565 = vpow.pop %v1564
    %v1566 = vmul.f32 %v1560, 1.442695
    %v1567 = vpow.pop %v1566
    %v1568 = vmul.f32 %v1561, 1.442695
    %v1569 = vpow.pop %v1568
    %v1570 = vsel %vm608, %v1563, 0.0
    %1571 = vadd.xlane.f32.xlu0 %v1570
    %v1572 = vpop.xlane.xlu0 %1571
    %v1573 = vsel %vm608, %v1565, 0.0
    %1574 = vadd.xlane.f32.xlu0 %v1573
    %v1575 = vpop.xlane.xlu0 %1574
    %v1576 = vsel %vm608, %v1567, 0.0
    %1577 = vadd.xlane.f32.xlu0 %v1576
    %v1578 = vpop.xlane.xlu0 %1577
    %v1579 = vsel %vm608, %v1569, 0.0
    %1580 = vadd.xlane.f32.xlu0 %v1579
    %v1581 = vpop.xlane.xlu0 %1580
    %v1582 = vrcp.pop %v1572
    %v1583 = vrcp.pop %v1575
    %v1584 = vrcp.pop %v1578
    %v1585 = vrcp.pop %v1581
    %v1586 = vmul.f32 %v1563, %v1582
    %v1587 = vmul.f32 %v1565, %v1583
    %v1588 = vmul.f32 %v1567, %v1584
    %v1589 = vmul.f32 %v1569, %v1585
    %v1590 = vpack.c.bf16 %v1587, %v1586
    %v1591 = vpack.c.bf16 %v1589, %v1588
    %1592 = vrot.lane.b32.xlu0 %v493, 32
    %v1593 = vpop.permute.xlu0 %1592
    %v1596 = vsel %vm608, %v1590, 0
    %1598 = vmatprep.subr.bf16.mxu0 0
    %1599 = vmatpush1.bf16.msra.mxu0 %v1593
    %1600 = vmatprep.subr.bf16.mxu0 0
    %1601 = vmatpush1.bf16.msra.mxu0 0
    %1602 = vmatprep.subr.bf16.mxu0 0
    %1603 = vmatpush1.bf16.msra.mxu0 0
    %1604 = vmatprep.subr.bf16.mxu0 0
    %1605 = vmatpush1.bf16.msra.mxu0 0
    %1606 = vmatprep.subr.bf16.mxu0 0
    %1607 = vmatpush1.bf16.msra.mxu0 0
    %1608 = vmatprep.subr.bf16.mxu0 0
    %1609 = vmatpush1.bf16.msra.mxu0 0
    %1610 = vmatprep.subr.bf16.mxu0 0
    %1611 = vmatpush1.bf16.msra.mxu0 0
    %1612 = vmatprep.subr.bf16.mxu0 0
    %1613 = vmatpush1.bf16.msra.mxu0 0
    %1614 = vmatprep.subr.bf16.mxu0 0
    %1615 = vmatpush1.bf16.msra.mxu0 0
    %1616 = vmatprep.subr.bf16.mxu0 0
    %1617 = vmatpush1.bf16.msra.mxu0 0
    %1618 = vmatprep.subr.bf16.mxu0 0
    %1619 = vmatpush1.bf16.msra.mxu0 0
    %1620 = vmatprep.subr.bf16.mxu0 0
    %1621 = vmatpush1.bf16.msra.mxu0 0
    %1622 = vmatprep.subr.bf16.mxu0 0
    %1623 = vmatpush1.bf16.msra.mxu0 0
    %1624 = vmatprep.subr.bf16.mxu0 0
    %1625 = vmatpush1.bf16.msra.mxu0 0
    %1626 = vmatprep.subr.bf16.mxu0 0
    %1627 = vmatpush1.bf16.msra.mxu0 0
    %1628 = vmatprep.subr.bf16.mxu0 0
    %1629 = vmatpush1.bf16.msra.mxu0 0
    %1630 = vmatprep.mubr.bf16.mxu0 0
    %1631 = vmatmul.mubr.bf16.gmra.mrb[0].mxu0 %v1596
    %v1632 = vpop.f32.mrb[0].mxu0
    %v1633 = vadd.f32 0.0, %v1632
    %v1634 = vpop.f32.mrb[0].mxu0
    %v1635 = vpop.f32.mrb[0].mxu0
    %v1636 = vadd.f32 0.0, %v1635
    %v1637 = vpop.f32.mrb[0].mxu0
    %1638 = vdwg.mxu0
    %1639 = vrot.lane.b32.xlu0 %v496, 32
    %v1640 = vpop.permute.xlu0 %1639
    %v1643 = vsel %vm608, %v1591, 0
    %1645 = vmatprep.subr.bf16.mxu0 0
    %1646 = vmatpush1.bf16.msra.mxu0 %v1640
    %1647 = vmatprep.subr.bf16.mxu0 0
    %1648 = vmatpush1.bf16.msra.mxu0 0
    %1649 = vmatprep.subr.bf16.mxu0 0
    %1650 = vmatpush1.bf16.msra.mxu0 0
    %1651 = vmatprep.subr.bf16.mxu0 0
    %1652 = vmatpush1.bf16.msra.mxu0 0
    %1653 = vmatprep.subr.bf16.mxu0 0
    %1654 = vmatpush1.bf16.msra.mxu0 0
    %1655 = vmatprep.subr.bf16.mxu0 0
    %1656 = vmatpush1.bf16.msra.mxu0 0
    %1657 = vmatprep.subr.bf16.mxu0 0
    %1658 = vmatpush1.bf16.msra.mxu0 0
    %1659 = vmatprep.subr.bf16.mxu0 0
    %1660 = vmatpush1.bf16.msra.mxu0 0
    %1661 = vmatprep.subr.bf16.mxu0 0
    %1662 = vmatpush1.bf16.msra.mxu0 0
    %1663 = vmatprep.subr.bf16.mxu0 0
    %1664 = vmatpush1.bf16.msra.mxu0 0
    %1665 = vmatprep.subr.bf16.mxu0 0
    %1666 = vmatpush1.bf16.msra.mxu0 0
    %1667 = vmatprep.subr.bf16.mxu0 0
    %1668 = vmatpush1.bf16.msra.mxu0 0
    %1669 = vmatprep.subr.bf16.mxu0 0
    %1670 = vmatpush1.bf16.msra.mxu0 0
    %1671 = vmatprep.subr.bf16.mxu0 0
    %1672 = vmatpush1.bf16.msra.mxu0 0
    %1673 = vmatprep.subr.bf16.mxu0 0
    %1674 = vmatpush1.bf16.msra.mxu0 0
    %1675 = vmatprep.subr.bf16.mxu0 0
    %1676 = vmatpush1.bf16.msra.mxu0 0
    %1677 = vmatprep.mubr.bf16.mxu0 0
    %1678 = vmatmul.mubr.bf16.gmra.mrb[0].mxu0 %v1643
    %v1679 = vpop.f32.mrb[0].mxu0
    %v1680 = vadd.f32 0.0, %v1679
    %v1681 = vpop.f32.mrb[0].mxu0
    %v1682 = vpop.f32.mrb[0].mxu0
    %v1683 = vadd.f32 0.0, %v1682
    %v1684 = vpop.f32.mrb[0].mxu0
    %1685 = vdwg.mxu0
    %v1686 = vpack.c.bf16 %v1636, %v1633
    %v1687 = vpack.c.bf16 %v1683, %v1680
    %v1692 = vunpack.c.l.b16 %v509
    %v1693 = vunpack.c.l.b16 %v510
    %v1694 = vunpack.c.l.b16 %v511
    %v1695 = vunpack.c.l.b16 %v512
    %v1696 = vpack.c.b16 %v1693, %v1692
    %v1697 = vpack.c.b16 %v1695, %v1694
    %v1701 = vsel %vm513, %v1686, 0
    %v1704 = vsel %vm513, %v1687, 0
    %1706 = vmatprep.subr.bf16.mxu0 0
    %1707 = vmatpush1.bf16.msra.mxu0 %v1696
    %1708 = vmatprep.subr.bf16.mxu0 0
    %1709 = vmatpush1.bf16.msra.mxu0 %v1697
    %1710 = vmatprep.subr.bf16.mxu0 0
    %1711 = vmatpush1.bf16.msra.mxu0 0
    %1712 = vmatprep.subr.bf16.mxu0 0
    %1713 = vmatpush1.bf16.msra.mxu0 0
    %1714 = vmatprep.subr.bf16.mxu0 0
    %1715 = vmatpush1.bf16.msra.mxu0 0
    %1716 = vmatprep.subr.bf16.mxu0 0
    %1717 = vmatpush1.bf16.msra.mxu0 0
    %1718 = vmatprep.subr.bf16.mxu0 0
    %1719 = vmatpush1.bf16.msra.mxu0 0
    %1720 = vmatprep.subr.bf16.mxu0 0
    %1721 = vmatpush1.bf16.msra.mxu0 0
    %1722 = vmatprep.subr.bf16.mxu0 0
    %1723 = vmatpush1.bf16.msra.mxu0 0
    %1724 = vmatprep.subr.bf16.mxu0 0
    %1725 = vmatpush1.bf16.msra.mxu0 0
    %1726 = vmatprep.subr.bf16.mxu0 0
    %1727 = vmatpush1.bf16.msra.mxu0 0
    %1728 = vmatprep.subr.bf16.mxu0 0
    %1729 = vmatpush1.bf16.msra.mxu0 0
    %1730 = vmatprep.subr.bf16.mxu0 0
    %1731 = vmatpush1.bf16.msra.mxu0 0
    %1732 = vmatprep.subr.bf16.mxu0 0
    %1733 = vmatpush1.bf16.msra.mxu0 0
    %1734 = vmatprep.subr.bf16.mxu0 0
    %1735 = vmatpush1.bf16.msra.mxu0 0
    %1736 = vmatprep.subr.bf16.mxu0 0
    %1737 = vmatpush1.bf16.msra.mxu0 0
    %1738 = vmatprep.mubr.bf16.mxu0 0
    %1739 = vmatmul.mubr.bf16.gmra.mrb[0].mxu0 %v1701
    %v1740 = vpop.f32.mrb[0].mxu0
    %v1741 = vadd.f32 0.0, %v1740
    %v1742 = vpop.f32.mrb[0].mxu0
    %v1743 = vpop.f32.mrb[0].mxu0
    %v1744 = vadd.f32 0.0, %v1743
    %v1745 = vpop.f32.mrb[0].mxu0
    %1746 = vmatprep.mubr.bf16.mxu0 0
    %1747 = vmatmul.mubr.bf16.gmra.mrb[0].mxu0 %v1704
    %v1748 = vpop.f32.mrb[0].mxu0
    %v1749 = vadd.f32 0.0, %v1748
    %v1750 = vpop.f32.mrb[0].mxu0
    %v1751 = vpop.f32.mrb[0].mxu0
    %v1752 = vadd.f32 0.0, %v1751
    %v1753 = vpop.f32.mrb[0].mxu0
    %1754 = vdwg.mxu0
    %v1755 = vadd.f32 %v1440, %v1741
    %v1756 = vadd.f32 %v1441, %v1744
    %v1757 = vadd.f32 %v1442, %v1749
    %v1758 = vadd.f32 %v1443, %v1752
    %v1759 = vld [vmem:[#allocation10] sm:$0x1]
    %v1761 = vlaneseq
    %v1762 = vshrl.u32 %v1761, 7
    %v1763 = vsub.s32 0, %v1762
    %v1764 = vrot.slane %v1759, %v1763
    %v1766 = vadd.f32 %v1755, %v1764
    %v1767 = vadd.f32 %v1756, %v1764
    %v1768 = vadd.f32 %v1757, %v1764
    %v1769 = vadd.f32 %v1758, %v1764
    %v1770 = vadd.f32 %v206, %v1766
    %v1771 = vadd.f32 %v207, %v1767
    %v1772 = vadd.f32 %v208, %v1768
    %v1773 = vadd.f32 %v209, %v1769
    %v1774 = vld [vmem:[#allocation17] sm:$0x1]
    %v1775 = vld [vmem:[#allocation19] sm:$0x1]
    %1776 = vadd.xlane.f32.xlu0 %v1770
    %v1777 = vpop.xlane.xlu0 %1776
    %1778 = vadd.xlane.f32.xlu0 %v1771
    %v1779 = vpop.xlane.xlu0 %1778
    %1780 = vadd.xlane.f32.xlu0 %v1772
    %v1781 = vpop.xlane.xlu0 %1780
    %1782 = vadd.xlane.f32.xlu0 %v1773
    %v1783 = vpop.xlane.xlu0 %1782
    %v1784 = vrcp.pop 128.0
    %v1785 = vmul.f32 %v1777, %v1784
    %v1786 = vmul.f32 %v1779, %v1784
    %v1787 = vmul.f32 %v1781, %v1784
    %v1788 = vmul.f32 %v1783, %v1784
    %v1789 = vsub.f32 %v1770, %v1785
    %v1790 = vsub.f32 %v1771, %v1786
    %v1791 = vsub.f32 %v1772, %v1787
    %v1792 = vsub.f32 %v1773, %v1788
    %v1793 = vmul.f32 %v1789, %v1789
    %v1794 = vmul.f32 %v1790, %v1790
    %v1795 = vmul.f32 %v1791, %v1791
    %v1796 = vmul.f32 %v1792, %v1792
    %1797 = vadd.xlane.f32.xlu0 %v1793
    %v1798 = vpop.xlane.xlu0 %1797
    %1799 = vadd.xlane.f32.xlu0 %v1794
    %v1800 = vpop.xlane.xlu0 %1799
    %1801 = vadd.xlane.f32.xlu0 %v1795
    %v1802 = vpop.xlane.xlu0 %1801
    %1803 = vadd.xlane.f32.xlu0 %v1796
    %v1804 = vpop.xlane.xlu0 %1803
    %v1805 = vmul.f32 %v1798, %v1784
    %v1806 = vmul.f32 %v1800, %v1784
    %v1807 = vmul.f32 %v1802, %v1784
    %v1808 = vmul.f32 %v1804, %v1784
    %v1809 = vadd.f32 %v1805, 1e-05
    %v1810 = vadd.f32 %v1806, 1e-05
    %v1811 = vadd.f32 %v1807, 1e-05
    %v1812 = vadd.f32 %v1808, 1e-05
    %v1813 = vrsqrt.pop %v1809
    %v1814 = vrsqrt.pop %v1810
    %v1815 = vrsqrt.pop %v1811
    %v1816 = vrsqrt.pop %v1812
    %v1817 = vmul.f32 %v1789, %v1813
    %v1818 = vmul.f32 %v1790, %v1814
    %v1819 = vmul.f32 %v1791, %v1815
    %v1820 = vmul.f32 %v1792, %v1816
    %v1822 = vlaneseq
    %v1823 = vshrl.u32 %v1822, 7
    %v1824 = vsub.s32 0, %v1823
    %v1825 = vrot.slane %v1774, %v1824
    %v1827 = vmul.f32 %v1817, %v1825
    %v1828 = vmul.f32 %v1818, %v1825
    %v1829 = vmul.f32 %v1819, %v1825
    %v1830 = vmul.f32 %v1820, %v1825
    %v1832 = vlaneseq
    %v1833 = vshrl.u32 %v1832, 7
    %v1834 = vsub.s32 0, %v1833
    %v1835 = vrot.slane %v1775, %v1834
    %v1837 = vadd.f32 %v1827, %v1835
    %v1838 = vadd.f32 %v1828, %v1835
    %v1839 = vadd.f32 %v1829, %v1835
    %v1840 = vadd.f32 %v1830, %v1835
    %v1841 = vpack.c.bf16 %v1838, %v1837
    %v1842 = vpack.c.bf16 %v1840, %v1839
    %v1843 = vld [vmem:[#allocation11] sm:$0xff]
    %v1844 = vld [vmem:[#allocation11 + $0x8] sm:$0xff]
    %v1845 = vld [vmem:[#allocation11 + $0x10] sm:$0xff]
    %v1846 = vld [vmem:[#allocation11 + $0x18] sm:$0xff]
    %v1847 = vld [vmem:[#allocation11 + $0x20] sm:$0xff]
    %v1848 = vld [vmem:[#allocation11 + $0x28] sm:$0xff]
    %v1849 = vld [vmem:[#allocation11 + $0x30] sm:$0xff]
    %v1850 = vld [vmem:[#allocation11 + $0x38] sm:$0xff]
    %v1851 = vld [vmem:[#allocation11 + $0x40] sm:$0xff]
    %v1852 = vld [vmem:[#allocation11 + $0x48] sm:$0xff]
    %v1853 = vld [vmem:[#allocation11 + $0x50] sm:$0xff]
    %v1854 = vld [vmem:[#allocation11 + $0x58] sm:$0xff]
    %v1855 = vld [vmem:[#allocation11 + $0x60] sm:$0xff]
    %v1856 = vld [vmem:[#allocation11 + $0x68] sm:$0xff]
    %v1857 = vld [vmem:[#allocation11 + $0x70] sm:$0xff]
    %v1858 = vld [vmem:[#allocation11 + $0x78] sm:$0xff]
    %v1859 = vld [vmem:[#allocation13] sm:$0x3]
    %v1861 = vlaneseq
    %v1862 = vshrl.u32 %v1861, 7
    %v1863 = vsub.s32 0, %v1862
    %v1864 = vrot.slane %v1859, %v1863
    %v1865 = vlaneseq
    %v1866 = vshrl.u32 %v1865, 7
    %v1867 = vsub.s32 1, %v1866
    %v1868 = vrot.slane %v1859, %v1867
    %v1887 = vunpack.c.l.b16 %v1843
    %v1888 = vunpack.c.h.b16 %v1843
    %v1889 = vunpack.c.l.b16 %v1844
    %v1890 = vunpack.c.h.b16 %v1844
    %v1891 = vunpack.c.l.b16 %v1845
    %v1892 = vunpack.c.h.b16 %v1845
    %v1893 = vunpack.c.l.b16 %v1846
    %v1894 = vunpack.c.h.b16 %v1846
    %v1895 = vunpack.c.l.b16 %v1847
    %v1896 = vunpack.c.h.b16 %v1847
    %v1897 = vunpack.c.l.b16 %v1848
    %v1898 = vunpack.c.h.b16 %v1848
    %v1899 = vunpack.c.l.b16 %v1849
    %v1900 = vunpack.c.h.b16 %v1849
    %v1901 = vunpack.c.l.b16 %v1850
    %v1902 = vunpack.c.h.b16 %v1850
    %v1903 = vunpack.c.l.b16 %v1851
    %v1904 = vunpack.c.h.b16 %v1851
    %v1905 = vunpack.c.l.b16 %v1852
    %v1906 = vunpack.c.h.b16 %v1852
    %v1907 = vunpack.c.l.b16 %v1853
    %v1908 = vunpack.c.h.b16 %v1853
    %v1909 = vunpack.c.l.b16 %v1854
    %v1910 = vunpack.c.h.b16 %v1854
    %v1911 = vunpack.c.l.b16 %v1855
    %v1912 = vunpack.c.h.b16 %v1855
    %v1913 = vunpack.c.l.b16 %v1856
    %v1914 = vunpack.c.h.b16 %v1856
    %v1915 = vunpack.c.l.b16 %v1857
    %v1916 = vunpack.c.h.b16 %v1857
    %v1917 = vunpack.c.l.b16 %v1858
    %v1918 = vunpack.c.h.b16 %v1858
    %v1919 = vpack.c.b16 %v1889, %v1887
    %v1920 = vpack.c.b16 %v1890, %v1888
    %v1921 = vpack.c.b16 %v1893, %v1891
    %v1922 = vpack.c.b16 %v1894, %v1892
    %v1923 = vpack.c.b16 %v1897, %v1895
    %v1924 = vpack.c.b16 %v1898, %v1896
    %v1925 = vpack.c.b16 %v1901, %v1899
    %v1926 = vpack.c.b16 %v1902, %v1900
    %v1927 = vpack.c.b16 %v1905, %v1903
    %v1928 = vpack.c.b16 %v1906, %v1904
    %v1929 = vpack.c.b16 %v1909, %v1907
    %v1930 = vpack.c.b16 %v1910, %v1908
    %v1931 = vpack.c.b16 %v1913, %v1911
    %v1932 = vpack.c.b16 %v1914, %v1912
    %v1933 = vpack.c.b16 %v1917, %v1915
    %v1934 = vpack.c.b16 %v1918, %v1916
    %1951 = vmatprep.subr.bf16.mxu0 %v1920
    %1952 = vmatpush1.bf16.msra.mxu0 %v1919
    %1953 = vmatprep.subr.bf16.mxu0 %v1922
    %1954 = vmatpush1.bf16.msra.mxu0 %v1921
    %1955 = vmatprep.subr.bf16.mxu0 %v1924
    %1956 = vmatpush1.bf16.msra.mxu0 %v1923
    %1957 = vmatprep.subr.bf16.mxu0 %v1926
    %1958 = vmatpush1.bf16.msra.mxu0 %v1925
    %1959 = vmatprep.subr.bf16.mxu0 %v1928
    %1960 = vmatpush1.bf16.msra.mxu0 %v1927
    %1961 = vmatprep.subr.bf16.mxu0 %v1930
    %1962 = vmatpush1.bf16.msra.mxu0 %v1929
    %1963 = vmatprep.subr.bf16.mxu0 %v1932
    %1964 = vmatpush1.bf16.msra.mxu0 %v1931
    %1965 = vmatprep.subr.bf16.mxu0 %v1934
    %1966 = vmatpush1.bf16.msra.mxu0 %v1933
    %1967 = vmatprep.subr.bf16.mxu0 0
    %1968 = vmatpush1.bf16.msra.mxu0 0
    %1969 = vmatprep.subr.bf16.mxu0 0
    %1970 = vmatpush1.bf16.msra.mxu0 0
    %1971 = vmatprep.subr.bf16.mxu0 0
    %1972 = vmatpush1.bf16.msra.mxu0 0
    %1973 = vmatprep.subr.bf16.mxu0 0
    %1974 = vmatpush1.bf16.msra.mxu0 0
    %1975 = vmatprep.subr.bf16.mxu0 0
    %1976 = vmatpush1.bf16.msra.mxu0 0
    %1977 = vmatprep.subr.bf16.mxu0 0
    %1978 = vmatpush1.bf16.msra.mxu0 0
    %1979 = vmatprep.subr.bf16.mxu0 0
    %1980 = vmatpush1.bf16.msra.mxu0 0
    %1981 = vmatprep.subr.bf16.mxu0 0
    %1982 = vmatpush1.bf16.msra.mxu0 0
    %1983 = vmatprep.mubr.bf16.mxu0 0
    %1984 = vmatmul.mubr.bf16.gmra.mrb[0].mxu0 %v1841
    %v1985 = vpop.f32.mrb[0].mxu0
    %v1986 = vadd.f32 %v1864, %v1985
    %v1987 = vpop.f32.mrb[0].mxu0
    %v1988 = vadd.f32 %v1868, %v1987
    %v1989 = vpop.f32.mrb[0].mxu0
    %v1990 = vadd.f32 %v1864, %v1989
    %v1991 = vpop.f32.mrb[0].mxu0
    %v1992 = vadd.f32 %v1868, %v1991
    %1993 = vmatprep.mubr.bf16.mxu0 0
    %1994 = vmatmul.mubr.bf16.gmra.mrb[0].mxu0 %v1842
    %v1995 = vpop.f32.mrb[0].mxu0
    %v1996 = vadd.f32 %v1864, %v1995
    %v1997 = vpop.f32.mrb[0].mxu0
    %v1998 = vadd.f32 %v1868, %v1997
    %v1999 = vpop.f32.mrb[0].mxu0
    %v2000 = vadd.f32 %v1864, %v1999
    %v2001 = vpop.f32.mrb[0].mxu0
    %v2002 = vadd.f32 %v1868, %v2001
    %2003 = vdwg.mxu0
    %v2004 = vmul.f32 %v1986, %v1986
    %v2005 = vmul.f32 %v1988, %v1988
    %v2006 = vmul.f32 %v1990, %v1990
    %v2007 = vmul.f32 %v1992, %v1992
    %v2008 = vmul.f32 %v1996, %v1996
    %v2009 = vmul.f32 %v1998, %v1998
    %v2010 = vmul.f32 %v2000, %v2000
    %v2011 = vmul.f32 %v2002, %v2002
    %v2012 = vmul.f32 %v1986, %v2004
    %v2013 = vmul.f32 %v1988, %v2005
    %v2014 = vmul.f32 %v1990, %v2006
    %v2015 = vmul.f32 %v1992, %v2007
    %v2016 = vmul.f32 %v1996, %v2008
    %v2017 = vmul.f32 %v1998, %v2009
    %v2018 = vmul.f32 %v2000, %v2010
    %v2019 = vmul.f32 %v2002, %v2011
    %v2020 = vmul.f32 %v2012, 0.044715
    %v2021 = vmul.f32 %v2013, 0.044715
    %v2022 = vmul.f32 %v2014, 0.044715
    %v2023 = vmul.f32 %v2015, 0.044715
    %v2024 = vmul.f32 %v2016, 0.044715
    %v2025 = vmul.f32 %v2017, 0.044715
    %v2026 = vmul.f32 %v2018, 0.044715
    %v2027 = vmul.f32 %v2019, 0.044715
    %v2028 = vadd.f32 %v1986, %v2020
    %v2029 = vadd.f32 %v1988, %v2021
    %v2030 = vadd.f32 %v1990, %v2022
    %v2031 = vadd.f32 %v1992, %v2023
    %v2032 = vadd.f32 %v1996, %v2024
    %v2033 = vadd.f32 %v1998, %v2025
    %v2034 = vadd.f32 %v2000, %v2026
    %v2035 = vadd.f32 %v2002, %v2027
    %v2036 = vmul.f32 %v2028, 0.7978846
    %v2037 = vmul.f32 %v2029, 0.7978846
    %v2038 = vmul.f32 %v2030, 0.7978846
    %v2039 = vmul.f32 %v2031, 0.7978846
    %v2040 = vmul.f32 %v2032, 0.7978846
    %v2041 = vmul.f32 %v2033, 0.7978846
    %v2042 = vmul.f32 %v2034, 0.7978846
    %v2043 = vmul.f32 %v2035, 0.7978846
    %v2044 = vtanh.pop %v2036
    %v2045 = vtanh.pop %v2037
    %v2046 = vtanh.pop %v2038
    %v2047 = vtanh.pop %v2039
    %v2048 = vtanh.pop %v2040
    %v2049 = vtanh.pop %v2041
    %v2050 = vtanh.pop %v2042
    %v2051 = vtanh.pop %v2043
    %v2052 = vadd.f32 %v2044, 1.0
    %v2053 = vadd.f32 %v2045, 1.0
    %v2054 = vadd.f32 %v2046, 1.0
    %v2055 = vadd.f32 %v2047, 1.0
    %v2056 = vadd.f32 %v2048, 1.0
    %v2057 = vadd.f32 %v2049, 1.0
    %v2058 = vadd.f32 %v2050, 1.0
    %v2059 = vadd.f32 %v2051, 1.0
    %v2060 = vmul.f32 %v2052, 0.5
    %v2061 = vmul.f32 %v2053, 0.5
    %v2062 = vmul.f32 %v2054, 0.5
    %v2063 = vmul.f32 %v2055, 0.5
    %v2064 = vmul.f32 %v2056, 0.5
    %v2065 = vmul.f32 %v2057, 0.5
    %v2066 = vmul.f32 %v2058, 0.5
    %v2067 = vmul.f32 %v2059, 0.5
    %v2068 = vmul.f32 %v1986, %v2060
    %v2069 = vmul.f32 %v1988, %v2061
    %v2070 = vmul.f32 %v1990, %v2062
    %v2071 = vmul.f32 %v1992, %v2063
    %v2072 = vmul.f32 %v1996, %v2064
    %v2073 = vmul.f32 %v1998, %v2065
    %v2074 = vmul.f32 %v2000, %v2066
    %v2075 = vmul.f32 %v2002, %v2067
    %v2076 = vpack.c.bf16 %v2070, %v2068
    %v2077 = vpack.c.bf16 %v2071, %v2069
    %v2078 = vpack.c.bf16 %v2074, %v2072
    %v2079 = vpack.c.bf16 %v2075, %v2073
    %v2080 = vld [vmem:[#allocation14] sm:$0xf]
    %v2081 = vld [vmem:[#allocation14 + $0x4] sm:$0xf]
    %v2082 = vld [vmem:[#allocation14 + $0x8] sm:$0xf]
    %v2083 = vld [vmem:[#allocation14 + $0xc] sm:$0xf]
    %v2084 = vld [vmem:[#allocation14 + $0x10] sm:$0xf]
    %v2085 = vld [vmem:[#allocation14 + $0x14] sm:$0xf]
    %v2086 = vld [vmem:[#allocation14 + $0x18] sm:$0xf]
    %v2087 = vld [vmem:[#allocation14 + $0x1c] sm:$0xf]
    %v2088 = vld [vmem:[#allocation14 + $0x20] sm:$0xf]
    %v2089 = vld [vmem:[#allocation14 + $0x24] sm:$0xf]
    %v2090 = vld [vmem:[#allocation14 + $0x28] sm:$0xf]
    %v2091 = vld [vmem:[#allocation14 + $0x2c] sm:$0xf]
    %v2092 = vld [vmem:[#allocation14 + $0x30] sm:$0xf]
    %v2093 = vld [vmem:[#allocation14 + $0x34] sm:$0xf]
    %v2094 = vld [vmem:[#allocation14 + $0x38] sm:$0xf]
    %v2095 = vld [vmem:[#allocation14 + $0x3c] sm:$0xf]
    %v2096 = vld [vmem:[#allocation14 + $0x40] sm:$0xf]
    %v2097 = vld [vmem:[#allocation14 + $0x44] sm:$0xf]
    %v2098 = vld [vmem:[#allocation14 + $0x48] sm:$0xf]
    %v2099 = vld [vmem:[#allocation14 + $0x4c] sm:$0xf]
    %v2100 = vld [vmem:[#allocation14 + $0x50] sm:$0xf]
    %v2101 = vld [vmem:[#allocation14 + $0x54] sm:$0xf]
    %v2102 = vld [vmem:[#allocation14 + $0x58] sm:$0xf]
    %v2103 = vld [vmem:[#allocation14 + $0x5c] sm:$0xf]
    %v2104 = vld [vmem:[#allocation14 + $0x60] sm:$0xf]
    %v2105 = vld [vmem:[#allocation14 + $0x64] sm:$0xf]
    %v2106 = vld [vmem:[#allocation14 + $0x68] sm:$0xf]
    %v2107 = vld [vmem:[#allocation14 + $0x6c] sm:$0xf]
    %v2108 = vld [vmem:[#allocation14 + $0x70] sm:$0xf]
    %v2109 = vld [vmem:[#allocation14 + $0x74] sm:$0xf]
    %v2110 = vld [vmem:[#allocation14 + $0x78] sm:$0xf]
    %v2111 = vld [vmem:[#allocation14 + $0x7c] sm:$0xf]
    %v2112 = vld [vmem:[#allocation16] sm:$0x1]
    %v2114 = vlaneseq
    %v2115 = vshrl.u32 %v2114, 7
    %v2116 = vsub.s32 0, %v2115
    %v2117 = vrot.slane %v2112, %v2116
    %v2151 = vunpack.c.l.b16 %v2080
    %v2152 = vunpack.c.l.b16 %v2081
    %v2153 = vunpack.c.l.b16 %v2082
    %v2154 = vunpack.c.l.b16 %v2083
    %v2155 = vunpack.c.l.b16 %v2084
    %v2156 = vunpack.c.l.b16 %v2085
    %v2157 = vunpack.c.l.b16 %v2086
    %v2158 = vunpack.c.l.b16 %v2087
    %v2159 = vunpack.c.l.b16 %v2088
    %v2160 = vunpack.c.l.b16 %v2089
    %v2161 = vunpack.c.l.b16 %v2090
    %v2162 = vunpack.c.l.b16 %v2091
    %v2163 = vunpack.c.l.b16 %v2092
    %v2164 = vunpack.c.l.b16 %v2093
    %v2165 = vunpack.c.l.b16 %v2094
    %v2166 = vunpack.c.l.b16 %v2095
    %v2167 = vunpack.c.l.b16 %v2096
    %v2168 = vunpack.c.l.b16 %v2097
    %v2169 = vunpack.c.l.b16 %v2098
    %v2170 = vunpack.c.l.b16 %v2099
    %v2171 = vunpack.c.l.b16 %v2100
    %v2172 = vunpack.c.l.b16 %v2101
    %v2173 = vunpack.c.l.b16 %v2102
    %v2174 = vunpack.c.l.b16 %v2103
    %v2175 = vunpack.c.l.b16 %v2104
    %v2176 = vunpack.c.l.b16 %v2105
    %v2177 = vunpack.c.l.b16 %v2106
    %v2178 = vunpack.c.l.b16 %v2107
    %v2179 = vunpack.c.l.b16 %v2108
    %v2180 = vunpack.c.l.b16 %v2109
    %v2181 = vunpack.c.l.b16 %v2110
    %v2182 = vunpack.c.l.b16 %v2111
    %v2183 = vpack.c.b16 %v2152, %v2151
    %v2184 = vpack.c.b16 %v2154, %v2153
    %v2185 = vpack.c.b16 %v2156, %v2155
    %v2186 = vpack.c.b16 %v2158, %v2157
    %v2187 = vpack.c.b16 %v2160, %v2159
    %v2188 = vpack.c.b16 %v2162, %v2161
    %v2189 = vpack.c.b16 %v2164, %v2163
    %v2190 = vpack.c.b16 %v2166, %v2165
    %v2191 = vpack.c.b16 %v2168, %v2167
    %v2192 = vpack.c.b16 %v2170, %v2169
    %v2193 = vpack.c.b16 %v2172, %v2171
    %v2194 = vpack.c.b16 %v2174, %v2173
    %v2195 = vpack.c.b16 %v2176, %v2175
    %v2196 = vpack.c.b16 %v2178, %v2177
    %v2197 = vpack.c.b16 %v2180, %v2179
    %v2198 = vpack.c.b16 %v2182, %v2181
    %2215 = vmatprep.subr.bf16.mxu0 0
    %2216 = vmatpush1.bf16.msra.mxu0 %v2183
    %2217 = vmatprep.subr.bf16.mxu0 0
    %2218 = vmatpush1.bf16.msra.mxu0 %v2184
    %2219 = vmatprep.subr.bf16.mxu0 0
    %2220 = vmatpush1.bf16.msra.mxu0 %v2185
    %2221 = vmatprep.subr.bf16.mxu0 0
    %2222 = vmatpush1.bf16.msra.mxu0 %v2186
    %2223 = vmatprep.subr.bf16.mxu0 0
    %2224 = vmatpush1.bf16.msra.mxu0 %v2187
    %2225 = vmatprep.subr.bf16.mxu0 0
    %2226 = vmatpush1.bf16.msra.mxu0 %v2188
    %2227 = vmatprep.subr.bf16.mxu0 0
    %2228 = vmatpush1.bf16.msra.mxu0 %v2189
    %2229 = vmatprep.subr.bf16.mxu0 0
    %2230 = vmatpush1.bf16.msra.mxu0 %v2190
    %2231 = vmatprep.subr.bf16.mxu0 0
    %2232 = vmatpush1.bf16.msra.mxu0 %v2191
    %2233 = vmatprep.subr.bf16.mxu0 0
    %2234 = vmatpush1.bf16.msra.mxu0 %v2192
    %2235 = vmatprep.subr.bf16.mxu0 0
    %2236 = vmatpush1.bf16.msra.mxu0 %v2193
    %2237 = vmatprep.subr.bf16.mxu0 0
    %2238 = vmatpush1.bf16.msra.mxu0 %v2194
    %2239 = vmatprep.subr.bf16.mxu0 0
    %2240 = vmatpush1.bf16.msra.mxu0 %v2195
    %2241 = vmatprep.subr.bf16.mxu0 0
    %2242 = vmatpush1.bf16.msra.mxu0 %v2196
    %2243 = vmatprep.subr.bf16.mxu0 0
    %2244 = vmatpush1.bf16.msra.mxu0 %v2197
    %2245 = vmatprep.subr.bf16.mxu0 0
    %2246 = vmatpush1.bf16.msra.mxu0 %v2198
    %2247 = vmatprep.mubr.bf16.mxu0 %v2077
    %2248 = vmatmul.mubr.bf16.gmra.mrb[0].mxu0 %v2076
    %v2249 = vpop.f32.mrb[0].mxu0
    %v2250 = vadd.f32 %v2117, %v2249
    %v2251 = vpop.f32.mrb[0].mxu0
    %v2252 = vpop.f32.mrb[0].mxu0
    %v2253 = vadd.f32 %v2117, %v2252
    %v2254 = vpop.f32.mrb[0].mxu0
    %2255 = vmatprep.mubr.bf16.mxu0 %v2079
    %2256 = vmatmul.mubr.bf16.gmra.mrb[0].mxu0 %v2078
    %v2257 = vpop.f32.mrb[0].mxu0
    %v2258 = vadd.f32 %v2117, %v2257
    %v2259 = vpop.f32.mrb[0].mxu0
    %v2260 = vpop.f32.mrb[0].mxu0
    %v2261 = vadd.f32 %v2117, %v2260
    %v2262 = vpop.f32.mrb[0].mxu0
    %2263 = vdwg.mxu0
    %v2264 = vadd.f32 %v1837, %v2250
    %v2265 = vadd.f32 %v1838, %v2253
    %v2266 = vadd.f32 %v1839, %v2258
    %v2267 = vadd.f32 %v1840, %v2261
    %v2268 = vld [vmem:[#allocation20] sm:$0x1]
    %v2269 = vld [vmem:[#allocation22] sm:$0x1]
    %2270 = vadd.xlane.f32.xlu0 %v2264
    %v2271 = vpop.xlane.xlu0 %2270
    %2272 = vadd.xlane.f32.xlu0 %v2265
    %v2273 = vpop.xlane.xlu0 %2272
    %2274 = vadd.xlane.f32.xlu0 %v2266
    %v2275 = vpop.xlane.xlu0 %2274
    %2276 = vadd.xlane.f32.xlu0 %v2267
    %v2277 = vpop.xlane.xlu0 %2276
    %v2278 = vmul.f32 %v2271, %v1784
    %v2279 = vmul.f32 %v2273, %v1784
    %v2280 = vmul.f32 %v2275, %v1784
    %v2281 = vmul.f32 %v2277, %v1784
    %v2282 = vsub.f32 %v2264, %v2278
    %v2283 = vsub.f32 %v2265, %v2279
    %v2284 = vsub.f32 %v2266, %v2280
    %v2285 = vsub.f32 %v2267, %v2281
    %v2286 = vmul.f32 %v2282, %v2282
    %v2287 = vmul.f32 %v2283, %v2283
    %v2288 = vmul.f32 %v2284, %v2284
    %v2289 = vmul.f32 %v2285, %v2285
    %2290 = vadd.xlane.f32.xlu0 %v2286
    %v2291 = vpop.xlane.xlu0 %2290
    %2292 = vadd.xlane.f32.xlu0 %v2287
    %v2293 = vpop.xlane.xlu0 %2292
    %2294 = vadd.xlane.f32.xlu0 %v2288
    %v2295 = vpop.xlane.xlu0 %2294
    %2296 = vadd.xlane.f32.xlu0 %v2289
    %v2297 = vpop.xlane.xlu0 %2296
    %v2298 = vmul.f32 %v2291, %v1784
    %v2299 = vmul.f32 %v2293, %v1784
    %v2300 = vmul.f32 %v2295, %v1784
    %v2301 = vmul.f32 %v2297, %v1784
    %v2302 = vadd.f32 %v2298, 1e-05
    %v2303 = vadd.f32 %v2299, 1e-05
    %v2304 = vadd.f32 %v2300, 1e-05
    %v2305 = vadd.f32 %v2301, 1e-05
    %v2306 = vrsqrt.pop %v2302
    %v2307 = vrsqrt.pop %v2303
    %v2308 = vrsqrt.pop %v2304
    %v2309 = vrsqrt.pop %v2305
    %v2310 = vmul.f32 %v2282, %v2306
    %v2311 = vmul.f32 %v2283, %v2307
    %v2312 = vmul.f32 %v2284, %v2308
    %v2313 = vmul.f32 %v2285, %v2309
    %v2315 = vlaneseq
    %v2316 = vshrl.u32 %v2315, 7
    %v2317 = vsub.s32 0, %v2316
    %v2318 = vrot.slane %v2268, %v2317
    %v2320 = vmul.f32 %v2310, %v2318
    %v2321 = vmul.f32 %v2311, %v2318
    %v2322 = vmul.f32 %v2312, %v2318
    %v2323 = vmul.f32 %v2313, %v2318
    %v2325 = vlaneseq
    %v2326 = vshrl.u32 %v2325, 7
    %v2327 = vsub.s32 0, %v2326
    %v2328 = vrot.slane %v2269, %v2327
    %v2330 = vadd.f32 %v2320, %v2328
    %v2331 = vadd.f32 %v2321, %v2328
    %v2332 = vadd.f32 %v2322, %v2328
    %v2333 = vadd.f32 %v2323, %v2328
    %2334 = vst [vmem:[#allocation23] sm:$0xff] %v2330
    %2335 = vst [vmem:[#allocation23 + $0x8] sm:$0xff] %v2331
    %2336 = vst [vmem:[#allocation23 + $0x10] sm:$0xff] %v2332
    %2337 = vst [vmem:[#allocation23 + $0x18] sm:$0xff] %v2333
    // Predicated region
    $region106: #{tpu_custom_call.1} parent=1 // pred_check
      _
    $region107: #{tpu_custom_call.1} parent=1 // pred_check_branch
      %2339 = sbr.rel (0) target = $region109
    $region108: #{tpu_custom_call.1} parent=1 // pred_region
      %s2341 = ssub.s32 512, 512
      %2342 = vsyncadd [#allocation4], %s2341
      %s2343 = sshll.u32 [#allocation23], 4
      %s2344 = int_to_ptr.vmem [resolvable:$true] %s2343
      %2349 = dma.vmem_to_hbm [thread:$0]  %s2344, 512, %s13, [#allocation4], 128, 128, 8
    $region109: #{tpu_custom_call.1} parent=1 // pred_fallthru
      _
    // Predicated region
    $region110: #{tpu_custom_call.1} parent=1 // pred_check
      _
    $region111: #{tpu_custom_call.1} parent=1 // pred_check_branch
      %2351 = sbr.rel (0) target = $region113
    $region112: #{tpu_custom_call.1} parent=1 // pred_region
      %2352 = dma.done [#allocation4], 512
    $region113: #{tpu_custom_call.1} parent=1 // pred_fallthru
      _
    %2353 = vsyncpa [#allocation3], 1
    %2354 = vsyncpa [#allocation6], 1
    %2355 = vsyncpa [#allocation9], 1
    %2356 = vsyncpa [#allocation12], 1
    %2357 = vsyncpa [#allocation15], 1
    %2358 = vsyncpa [#allocation18], 1
    %2359 = vsyncpa [#allocation21], 1
    %2360 = vsyncpa [#allocation4], 1

</llo_original>
